<compile_context>
chip_gen: v7x
topology: tpu7x:2x2x1
jax: 0.10.0
libtpu: 0.0.40
codegen_flags: <defaults>
</compile_context>

<pallas_src>
import functools

import jax
import jax.numpy as jnp
from jax.experimental import pallas as pl
from jax.experimental.pallas import tpu as pltpu


_SQRT_2_OVER_PI = 0.7978845608028654  # sqrt(2 / pi), as in the PyTorch GELU module


def _gelu_tanh(h):
    """GELU (tanh approximation), exactly as in the PyTorch module, in h's dtype."""
    return 0.5 * h * (1.0 + jnp.tanh(_SQRT_2_OVER_PI * (h + 0.044715 * (h * h * h))))


def _ffn_resident_kernel(x_ref, w1_ref, b1_ref, w2_ref, b2_ref, o_ref, *, gelu_dtype):
    """One M tile with fully VMEM-resident weights: Linear -> GELU -> Linear -> store."""
    x = x_ref[...]                                                       # [tm, E]
    h = jnp.dot(x, w1_ref[...], preferred_element_type=jnp.float32)     # [tm, H] f32
    h = h + b1_ref[...].astype(jnp.float32)
    g = _gelu_tanh(h.astype(gelu_dtype)).astype(x.dtype)                 # model dtype for MXU
    out = jnp.dot(g, w2_ref[...], preferred_element_type=jnp.float32)   # [tm, E] f32
    o_ref[...] = (out + b2_ref[...].astype(jnp.float32)).astype(o_ref.dtype)


def _ffn_streamed_kernel(x_ref, w1_ref, b1_ref, w2_ref, b2_ref, o_ref, acc_ref, *, gelu_dtype):
    """One (M tile, H chunk) grid step; second matmul accumulated over H into f32 scratch."""
    j = pl.program_id(1)

    x = x_ref[...]                                                       # [tm, E]
    h = jnp.dot(x, w1_ref[...], preferred_element_type=jnp.float32)     # [tm, th] f32
    h = h + b1_ref[...].astype(jnp.float32)
    g = _gelu_tanh(h.astype(gelu_dtype)).astype(x.dtype)
    contrib = jnp.dot(g, w2_ref[...], preferred_element_type=jnp.float32)  # [tm, E] f32

    @pl.when(j == 0)
    def _():
        acc_ref[...] = contrib        # first chunk writes directly: no zero-fill + vadd pass

    @pl.when(j > 0)
    def _():
        acc_ref[...] += contrib

    @pl.when(j == pl.num_programs(1) - 1)
    def _():
        o_ref[...] = (acc_ref[...] + b2_ref[...].astype(jnp.float32)).astype(o_ref.dtype)


def _round_down(x, m):
    return (x // m) * m


def feed_forward(x, w1, b1, w2, b2, *, tile_m=None, tile_h=None,
                 vmem_limit_bytes=None, weights_resident=None):
    """GPT FeedForward: GELU_tanh(x @ W1 + b1) @ W2 + b2.

    x: [B, T, E]; w1: [E, H]; b1: [H]; w2: [H, E]; b2: [E].
    Tile sizes / VMEM limits default to hardware-aware choices; pass explicit values
    to override. f32 inputs take the f32-matmul slow path (full-rate MXU needs bf16).
    """
    B, T, E = x.shape
    H = w1.shape[1]
    M = B * T
    itemsize = jnp.dtype(x.dtype).itemsize

    # ---- hardware-aware VMEM budget -----------------------------------------------
    try:
        vmem_cap = int(pltpu.get_tpu_info().vmem_capacity_bytes)
    except Exception:
        vmem_cap = 64 * 1024 * 1024                      # conservative (v7x per-core)
    if vmem_limit_bytes is None:
        # ~3/4 of physical VMEM: ~96 MiB on v5e/v6e (128 MiB parts), ~48 MiB on v7x (64 MiB).
        vmem_limit_bytes = min(100 * 1024 * 1024, (vmem_cap * 3) // 4)
    # Headroom for the compiler-managed [tm, th] GELU intermediates / internal scratch.
    budget = max(vmem_limit_bytes - 10 * 1024 * 1024, vmem_limit_bytes // 2)

    # ---- resident-weights decision (drop the H grid axis for small/medium models) --
    w_bytes = (w1.size + b1.size + w2.size + b2.size) * itemsize
    if weights_resident is None:
        weights_resident = (2 * w_bytes) <= (budget // 2)   # 2x: BlockSpec double-buffers

    # ---- hidden-dim chunk (streamed path only; must divide H exactly) --------------
    if weights_resident:
        th = H
    else:
        cap = tile_h if tile_h is not None else (512 if vmem_cap > 96 * 1024 * 1024 else 256)
        th = None
        for cand in range(_round_down(min(cap, H), 128), 0, -128):
            if H % cand == 0:                             # no unmasked reduction tail
                th = cand
                break
        if th is None:
            th = H

    # ---- token-tile size (the arithmetic-intensity knob) ---------------------------
    def _fits(tm_):
        x_out = 4 * tm_ * E * itemsize                    # x + out tiles, double-buffered
        if weights_resident:
            fixed = 2 * w_bytes
            inter = tm_ * H * (4 + itemsize)              # f32 h + model-dtype g
            return fixed + x_out + inter <= budget
        fixed = 2 * (E * th + th + th * E + E) * itemsize  # W1/b1/W2/b2 chunks, double-buffered
        acc = tm_ * E * 4                                  # f32 accumulator scratch
        inter = tm_ * th * (4 + itemsize)
        return fixed + x_out + acc + inter <= budget

    if tile_m is not None:
        tm = min(tile_m, M)
    else:
        tm = None
        for cand in range(2048, 0, -128):                 # largest multiple of 128 that fits
            if cand <= M and _fits(cand):
                tm = cand
                break
        if tm is None:
            tm = min(M, 128)
        # Keep >= 2 M tiles so the "parallel" axis can shard across TensorCores (v7x
        # megacore); only applied to the auto choice and only when M is large enough.
        if M >= 256 and tm > _round_down(M // 2, 128):
            tm = max(128, _round_down(M // 2, 128))
    tm = min(tm, M)
    # NOTE: if tm == M and M is not 8/16-row aligned this is still legal (full dim) but
    # forces a padded layout; callers should prefer M aligned to the sublane count.

    x2 = x.reshape(M, E)
    b1_2 = b1.reshape(1, H)
    b2_2 = b2.reshape(1, E)
    gelu_dtype = jnp.float32 if x.dtype == jnp.float32 else x.dtype

    num_m_tiles = pl.cdiv(M, tm)

    # Advisory cost estimate: weights are re-streamed once per M tile in the streamed
    # path, fetched once in the resident path.
    streamed_weight_bytes = w_bytes * (1 if weights_resident else num_m_tiles)
    cost = pl.CostEstimate(
        flops=4 * M * E * H,                              # two [M,E,H]-shaped matmuls
        transcendentals=M * H,                            # one tanh per hidden activation
        bytes_accessed=(x2.size * itemsize + M * E * itemsize + streamed_weight_bytes),
    )

    if weights_resident:
        out2 = pl.pallas_call(
            functools.partial(_ffn_resident_kernel, gelu_dtype=gelu_dtype),
            out_shape=jax.ShapeDtypeStruct((M, E), x.dtype),
            grid_spec=pltpu.PrefetchScalarGridSpec(
                num_scalar_prefetch=0,
                grid=(num_m_tiles,),
                in_specs=[
                    pl.BlockSpec((tm, E), lambda i: (i, 0)),   # x tile
                    pl.BlockSpec((E, H), lambda i: (0, 0)),    # W1, constant index -> DMA'd once
                    pl.BlockSpec((1, H), lambda i: (0, 0)),    # b1
                    pl.BlockSpec((H, E), lambda i: (0, 0)),    # W2, constant index -> DMA'd once
                    pl.BlockSpec((1, E), lambda i: (0, 0)),    # b2
                ],
                out_specs=pl.BlockSpec((tm, E), lambda i: (i, 0)),
            ),
            compiler_params=pltpu.CompilerParams(
                dimension_semantics=("parallel",),             # M tiles shard across TCs
                vmem_limit_bytes=vmem_limit_bytes,
            ),
            cost_estimate=cost,
        )(x2, w1, b1_2, w2, b2_2)
    else:
        out2 = pl.pallas_call(
            functools.partial(_ffn_streamed_kernel, gelu_dtype=gelu_dtype),
            out_shape=jax.ShapeDtypeStruct((M, E), x.dtype),
            grid_spec=pltpu.PrefetchScalarGridSpec(
                num_scalar_prefetch=0,
                grid=(num_m_tiles, H // th),
                in_specs=[
                    pl.BlockSpec((tm, E), lambda i, j: (i, 0)),   # x tile (constant over j)
                    pl.BlockSpec((E, th), lambda i, j: (0, j)),   # W1 column chunk
                    pl.BlockSpec((1, th), lambda i, j: (0, j)),   # b1 chunk
                    pl.BlockSpec((th, E), lambda i, j: (j, 0)),   # W2 row chunk
                    pl.BlockSpec((1, E), lambda i, j: (0, 0)),    # b2 (tiny, resident)
                ],
                out_specs=pl.BlockSpec((tm, E), lambda i, j: (i, 0)),
                scratch_shapes=[pltpu.VMEM((tm, E), jnp.float32)],  # f32 accumulator
            ),
            compiler_params=pltpu.CompilerParams(
                dimension_semantics=("parallel", "arbitrary"),   # H is the reduction axis
                vmem_limit_bytes=vmem_limit_bytes,
            ),
            cost_estimate=cost,
        )(x2, w1, b1_2, w2, b2_2)

    return out2.reshape(B, T, E)


def reference_feed_forward(x, w1, b1, w2, b2):
    h = jnp.einsum("bte,eh->bth", x, w1) + b1
    c = jnp.sqrt(2.0 / jnp.pi)
    g = 0.5 * h * (1.0 + jnp.tanh(c * (h + 0.044715 * h**3)))
    return jnp.einsum("bth,he->bte", g, w2) + b2


if __name__ == "__main__":
    # Small but lane-aligned config: emb_dim = 128 -> hidden = 4 * emb_dim = 512.
    B, T, E = 2, 256, 128
    H = 4 * E

    key = jax.random.PRNGKey(0)
    kx, kw1, kb1, kw2, kb2 = jax.random.split(key, 5)

    x = jax.random.normal(kx, (B, T, E), dtype=jnp.float32)
    w1 = jax.random.normal(kw1, (E, H), dtype=jnp.float32) * 0.02
    b1 = jax.random.normal(kb1, (H,), dtype=jnp.float32) * 0.02
    w2 = jax.random.normal(kw2, (H, E), dtype=jnp.float32) * 0.02
    b2 = jax.random.normal(kb2, (E,), dtype=jnp.float32) * 0.02

    ref = reference_feed_forward(x, w1, b1, w2, b2)

    # 1) Auto tiling: weights fit in VMEM -> resident fast path (1-D grid over M tiles).
    out = jax.block_until_ready(feed_forward(x, w1, b1, w2, b2))
    assert out.shape == (B, T, E)
    assert jnp.allclose(out, ref, atol=1e-4, rtol=1e-4), "mismatch vs reference (resident path)"

    # 2) Forced streamed path with small tiles: exercises the M x H grid and the
    #    direct-write / accumulate / finalize phases of the f32 accumulator.
    out_s = jax.block_until_ready(feed_forward(
        x, w1, b1, w2, b2, tile_m=128, tile_h=128, weights_resident=False))
    assert jnp.allclose(out_s, ref, atol=1e-4, rtol=1e-4), "mismatch vs reference (streamed path)"

    # 3) bf16 operand path: bf16 MXU operands at full rate, f32 accumulation, GELU
    #    polynomial in bf16 (packed VPU/EUP on v6e/v7x).
    xb = x.astype(jnp.bfloat16)
    out_b = jax.block_until_ready(feed_forward(
        xb, w1.astype(jnp.bfloat16), b1.astype(jnp.bfloat16),
        w2.astype(jnp.bfloat16), b2.astype(jnp.bfloat16)))
    assert out_b.dtype == jnp.bfloat16
    assert jnp.allclose(out_b.astype(jnp.float32), ref, atol=5e-2, rtol=5e-2), "bf16 path mismatch"

    print("KERNEL_OK")
</pallas_src>

<mosaic_0001>
module attributes {stable_mosaic.version = 11 : i64} {
  func.func @_ffn_resident_kernel(%arg0: i32, %arg1: memref<256x128xf32, #tpu.memory_space<vmem>>, %arg2: memref<128x512xf32, #tpu.memory_space<vmem>>, %arg3: memref<1x512xf32, #tpu.memory_space<vmem>>, %arg4: memref<512x128xf32, #tpu.memory_space<vmem>>, %arg5: memref<1x128xf32, #tpu.memory_space<vmem>>, %arg6: memref<256x128xf32, #tpu.memory_space<vmem>>) attributes {dimension_semantics = [#tpu.dimension_semantics<parallel>], iteration_bounds = array<i64: 2>, scalar_prefetch = 0 : i64, scratch_operands = 0 : i64, tpu.core_type = #tpu.core_type<tc>, window_params = [{transform_indices = @transform_0, window_bounds = array<i64: 256, 128>}, {pipeline_mode = #tpu.pipeline_mode<synchronous>, transform_indices = @transform_1, window_bounds = array<i64: 128, 512>}, {pipeline_mode = #tpu.pipeline_mode<synchronous>, transform_indices = @transform_2, window_bounds = array<i64: 1, 512>}, {pipeline_mode = #tpu.pipeline_mode<synchronous>, transform_indices = @transform_3, window_bounds = array<i64: 512, 128>}, {pipeline_mode = #tpu.pipeline_mode<synchronous>, transform_indices = @transform_4, window_bounds = array<i64: 1, 128>}, {transform_indices = @transform_5, window_bounds = array<i64: 256, 128>}]} {
    %c0 = arith.constant 0 : index
    %c0_0 = arith.constant 0 : index
    %0 = vector.load %arg1[%c0, %c0_0] : memref<256x128xf32, #tpu.memory_space<vmem>>, vector<256x128xf32>
    %c0_1 = arith.constant 0 : index
    %c0_2 = arith.constant 0 : index
    %1 = vector.load %arg2[%c0_1, %c0_2] : memref<128x512xf32, #tpu.memory_space<vmem>>, vector<128x512xf32>
    %cst = arith.constant dense<0.000000e+00> : vector<256x512xf32>
    %2 = tpu.matmul %0, %1, %cst {dimension_numbers = #tpu.dot_dimension_numbers<[1], [0], [0], [1], [0, 0, 1, 1], [], []>} : vector<256x128xf32>, vector<128x512xf32>, vector<256x512xf32> -> vector<256x512xf32>
    %c0_3 = arith.constant 0 : index
    %c0_4 = arith.constant 0 : index
    %3 = vector.load %arg3[%c0_3, %c0_4] : memref<1x512xf32, #tpu.memory_space<vmem>>, vector<1x512xf32>
    %4 = vector.broadcast %3 : vector<1x512xf32> to vector<256x512xf32>
    %5 = arith.addf %2, %4 : vector<256x512xf32>
    %cst_5 = arith.constant 5.000000e-01 : f32
    %6 = vector.broadcast %cst_5 : f32 to vector<256x512xf32>
    %7 = arith.mulf %6, %5 : vector<256x512xf32>
    %8 = arith.mulf %5, %5 : vector<256x512xf32>
    %9 = arith.mulf %8, %5 : vector<256x512xf32>
    %cst_6 = arith.constant 4.471500e-02 : f32
    %10 = vector.broadcast %cst_6 : f32 to vector<256x512xf32>
    %11 = arith.mulf %10, %9 : vector<256x512xf32>
    %12 = arith.addf %5, %11 : vector<256x512xf32>
    %cst_7 = arith.constant 0.797884583 : f32
    %13 = vector.broadcast %cst_7 : f32 to vector<256x512xf32>
    %14 = arith.mulf %13, %12 : vector<256x512xf32>
    %15 = math.tanh %14 : vector<256x512xf32>
    %cst_8 = arith.constant 1.000000e+00 : f32
    %16 = vector.broadcast %cst_8 : f32 to vector<256x512xf32>
    %17 = arith.addf %16, %15 : vector<256x512xf32>
    %18 = arith.mulf %7, %17 : vector<256x512xf32>
    %c0_9 = arith.constant 0 : index
    %c0_10 = arith.constant 0 : index
    %19 = vector.load %arg4[%c0_9, %c0_10] : memref<512x128xf32, #tpu.memory_space<vmem>>, vector<512x128xf32>
    %cst_11 = arith.constant dense<0.000000e+00> : vector<256x128xf32>
    %20 = tpu.matmul %18, %19, %cst_11 {dimension_numbers = #tpu.dot_dimension_numbers<[1], [0], [0], [1], [0, 0, 1, 1], [], []>} : vector<256x512xf32>, vector<512x128xf32>, vector<256x128xf32> -> vector<256x128xf32>
    %c0_12 = arith.constant 0 : index
    %c0_13 = arith.constant 0 : index
    %21 = vector.load %arg5[%c0_12, %c0_13] : memref<1x128xf32, #tpu.memory_space<vmem>>, vector<1x128xf32>
    %22 = vector.broadcast %21 : vector<1x128xf32> to vector<256x128xf32>
    %23 = arith.addf %20, %22 : vector<256x128xf32>
    %c0_14 = arith.constant 0 : index
    %c0_15 = arith.constant 0 : index
    %24 = vector.load %arg6[%c0_14, %c0_15] : memref<256x128xf32, #tpu.memory_space<vmem>>, vector<256x128xf32>
    tpu.vector_store %arg6[%c0_14, %c0_15], %23 {strides = array<i32>} : memref<256x128xf32, #tpu.memory_space<vmem>>, vector<256x128xf32>,
    return
  }
  func.func @transform_0(%arg0: i32) -> (i32, i32) {
    %c0_i32 = arith.constant 0 : i32
    %c0_i32_0 = arith.constant 0 : i32
    return %arg0, %c0_i32 : i32, i32
  }
  func.func @transform_1(%arg0: i32) -> (i32, i32) {
    %c0_i32 = arith.constant 0 : i32
    %c0_i32_0 = arith.constant 0 : i32
    %c0_i32_1 = arith.constant 0 : i32
    return %c0_i32, %c0_i32_0 : i32, i32
  }
  func.func @transform_2(%arg0: i32) -> (i32, i32) {
    %c0_i32 = arith.constant 0 : i32
    %c0_i32_0 = arith.constant 0 : i32
    %c0_i32_1 = arith.constant 0 : i32
    return %c0_i32, %c0_i32_0 : i32, i32
  }
  func.func @transform_3(%arg0: i32) -> (i32, i32) {
    %c0_i32 = arith.constant 0 : i32
    %c0_i32_0 = arith.constant 0 : i32
    %c0_i32_1 = arith.constant 0 : i32
    return %c0_i32, %c0_i32_0 : i32, i32
  }
  func.func @transform_4(%arg0: i32) -> (i32, i32) {
    %c0_i32 = arith.constant 0 : i32
    %c0_i32_0 = arith.constant 0 : i32
    %c0_i32_1 = arith.constant 0 : i32
    return %c0_i32, %c0_i32_0 : i32, i32
  }
  func.func @transform_5(%arg0: i32) -> (i32, i32) {
    %c0_i32 = arith.constant 0 : i32
    %c0_i32_0 = arith.constant 0 : i32
    return %arg0, %c0_i32 : i32, i32
  }
}

</mosaic_0001>

<llo_original>
// kernel: tpu_custom_call.1
$region0: #{tpu_custom_call.1}
  #allocation0 [shape = 'u32[]', space=smem, size = 0x4, offset = 0x4, fixed_abs, tag = 'smem constant byte address 0x4 - core index']
  #allocation1 [shape = 'u32[144,128]{1,0:T(1,128)}', space=vmem, size = 0x12000, scoped, tag = 'internal scratch']
  %s0 = inlined_call_operand.hbm [shape: f32[512,128], index: 0, kind: input, shape index: {}]
  %s1 = inlined_call_operand.hbm [shape: f32[128,512], index: 1, kind: input, shape index: {}]
  %s2 = inlined_call_operand.vmem [shape: f32[1,512], index: 2, kind: input, shape index: {}]
  %s3 = inlined_call_operand.hbm [shape: f32[512,128], index: 3, kind: input, shape index: {}]
  %s4 = inlined_call_operand.vmem [shape: f32[1,128], index: 4, kind: input, shape index: {}]
  %s5 = inlined_call_operand.hbm [shape: f32[512,128], index: 5, kind: output, shape index: {}]
  %s6 = sld [smem:[#allocation0]]
  $region65: #{tpu_custom_call.1} parent=0
    _
  %s8 = ssub.s32 1, %s6
  %s9 = scalar_select 0, %s8, %s6
  $region1: #{tpu_custom_call.1} parent=0
    #allocation2 [shape = 'u8[262144]{0}', space=vmem, size = 0x40000, scoped, tag = 'input window, operand 0']
    #allocation3 [shape = 's32[2]{0}', space=sflag, size = 0x8, scoped, tag = 'scoped memory for tpu_custom_call.1']
    #allocation4 [shape = 's32[2]{0}', space=sflag, size = 0x8, scoped, tag = 'scoped memory for tpu_custom_call.1']
    #allocation5 [shape = 'u8[262144]{0}', space=vmem, size = 0x40000, scoped, tag = 'input window, operand 1, single buffered']
    #allocation6 [shape = 's32[1]{0}', space=sflag, size = 0x4, scoped, tag = 'scoped memory for tpu_custom_call.1']
    #allocation7 [shape = 'u8[262144]{0}', space=vmem, size = 0x40000, scoped, tag = 'input window, operand 3, single buffered']
    #allocation8 [shape = 'u8[262144]{0}', space=vmem, size = 0x40000, scoped, tag = 'output window, operand 0']
    %10 = vsyncpa [#allocation3], 0
    %s11 = scalar_lea.sflag [#allocation3], 1
    %12 = vsyncpa %s11, 0
    %13 = vsyncpa [#allocation6], 0
    %14 = vsyncpa [#allocation4], 0
    %s15 = scalar_lea.sflag [#allocation4], 1
    %16 = vsyncpa %s15, 0
    loop: start=0, step=1, limit=4
    $region2: #{tpu_custom_call.1} parent=1 // loop_pre_header
      _
    $region3: #{tpu_custom_call.1} parent=1 // loop_header
      %s18 = sphi 0, %s22
      %p19 = scmp.ge.s32.totalorder %s18, 4
      %s28 = sphi 0, %s30
      %s31 = sphi 0, %s28
      %s32 = sphi 0, %s31
      %s48 = sphi 0, %s32
      %s52 = sphi 0, %s52
      %s54 = sphi 0, %s52
      %s55 = sphi 0, %s54
      %s69 = sphi 0, %s55
      %s73 = sphi 0, %s73
      %s75 = sphi 0, %s73
      %s76 = sphi 0, %s75
      %s90 = sphi 0, %s76
      %s94 = sphi 0, %s94
      %s96 = sphi 0, %s94
      %s97 = sphi 0, %s96
      %s111 = sphi 0, %s97
      %s115 = sphi 0, %s115
      %s117 = sphi 0, %s115
      %s118 = sphi 0, %s117
      %s132 = sphi 0, %s118
      %s138 = sphi 0, %s140
      %s141 = sphi 0, %s138
      %s142 = sphi 0, %s141
      %s158 = sphi 0, %s142
    $region4: #{tpu_custom_call.1} parent=1 // loop_header_branch
      %21 = sbr.rel (%p19) target = $region8
    $region5: #{tpu_custom_call.1} parent=1 // loop_body
      %s23 = ssub.s32 %s18, 1
      %s24 = ssub.s32 %s18, 2
      %s25 = sadd.s32 %s18, 1
      %s26 = ssub.s32 %s18, %s25
      %p27 = scmp.eq.s32.totalorder %s26, 0
      %s29 = sadd.s32 %s28, 1
      %s30 = scalar_select %p27, %s28, %s29
      %p33 = pneg %p27
      %p34 = scmp.eq.s32.totalorder %s18, 1
      %p35 = por %p33, %p34
      %p36 = scmp.ne.s32.totalorder %s28, %s31
      %p37 = scmp.eq.s32.totalorder %s18, 0
      %p38 = por %p36, %p37
      %p39 = scmp.ne.s32.totalorder %s28, %s31
      %p40 = scmp.eq.s32.totalorder %s23, 1
      %p41 = por %p39, %p40
      %p42 = scmp.ne.s32.totalorder %s31, %s32
      %p43 = scmp.eq.s32.totalorder %s23, 0
      %p44 = por %p42, %p43
      %p45 = scmp.ne.s32.totalorder %s31, %s32
      %p46 = scmp.eq.s32.totalorder %s24, 1
      %p47 = por %p45, %p46
      %p49 = scmp.ne.s32.totalorder %s32, %s48
      %p50 = scmp.eq.s32.totalorder %s24, 0
      %p51 = por %p49, %p50
      %s53 = sadd.s32 %s52, 1
      %p56 = scmp.eq.s32.totalorder %s18, 1
      %p57 = scmp.ne.s32.totalorder %s52, %s54
      %p58 = scmp.eq.s32.totalorder %s18, 0
      %p59 = por %p57, %p58
      %p60 = scmp.ne.s32.totalorder %s52, %s54
      %p61 = scmp.eq.s32.totalorder %s23, 1
      %p62 = por %p60, %p61
      %p63 = scmp.ne.s32.totalorder %s54, %s55
      %p64 = scmp.eq.s32.totalorder %s23, 0
      %p65 = por %p63, %p64
      %p66 = scmp.ne.s32.totalorder %s54, %s55
      %p67 = scmp.eq.s32.totalorder %s24, 1
      %p68 = por %p66, %p67
      %p70 = scmp.ne.s32.totalorder %s55, %s69
      %p71 = scmp.eq.s32.totalorder %s24, 0
      %p72 = por %p70, %p71
      %s74 = sadd.s32 %s73, 1
      %p77 = scmp.eq.s32.totalorder %s18, 1
      %p78 = scmp.ne.s32.totalorder %s73, %s75
      %p79 = scmp.eq.s32.totalorder %s18, 0
      %p80 = por %p78, %p79
      %p81 = scmp.ne.s32.totalorder %s73, %s75
      %p82 = scmp.eq.s32.totalorder %s23, 1
      %p83 = por %p81, %p82
      %p84 = scmp.ne.s32.totalorder %s75, %s76
      %p85 = scmp.eq.s32.totalorder %s23, 0
      %p86 = por %p84, %p85
      %p87 = scmp.ne.s32.totalorder %s75, %s76
      %p88 = scmp.eq.s32.totalorder %s24, 1
      %p89 = por %p87, %p88
      %p91 = scmp.ne.s32.totalorder %s76, %s90
      %p92 = scmp.eq.s32.totalorder %s24, 0
      %p93 = por %p91, %p92
      %s95 = sadd.s32 %s94, 1
      %p98 = scmp.eq.s32.totalorder %s18, 1
      %p99 = scmp.ne.s32.totalorder %s94, %s96
      %p100 = scmp.eq.s32.totalorder %s18, 0
      %p101 = por %p99, %p100
      %p102 = scmp.ne.s32.totalorder %s94, %s96
      %p103 = scmp.eq.s32.totalorder %s23, 1
      %p104 = por %p102, %p103
      %p105 = scmp.ne.s32.totalorder %s96, %s97
      %p106 = scmp.eq.s32.totalorder %s23, 0
      %p107 = por %p105, %p106
      %p108 = scmp.ne.s32.totalorder %s96, %s97
      %p109 = scmp.eq.s32.totalorder %s24, 1
      %p110 = por %p108, %p109
      %p112 = scmp.ne.s32.totalorder %s97, %s111
      %p113 = scmp.eq.s32.totalorder %s24, 0
      %p114 = por %p112, %p113
      %s116 = sadd.s32 %s115, 1
      %p119 = scmp.eq.s32.totalorder %s18, 1
      %p120 = scmp.ne.s32.totalorder %s115, %s117
      %p121 = scmp.eq.s32.totalorder %s18, 0
      %p122 = por %p120, %p121
      %p123 = scmp.ne.s32.totalorder %s115, %s117
      %p124 = scmp.eq.s32.totalorder %s23, 1
      %p125 = por %p123, %p124
      %p126 = scmp.ne.s32.totalorder %s117, %s118
      %p127 = scmp.eq.s32.totalorder %s23, 0
      %p128 = por %p126, %p127
      %p129 = scmp.ne.s32.totalorder %s117, %s118
      %p130 = scmp.eq.s32.totalorder %s24, 1
      %p131 = por %p129, %p130
      %p133 = scmp.ne.s32.totalorder %s118, %s132
      %p134 = scmp.eq.s32.totalorder %s24, 0
      %p135 = por %p133, %p134
      %s136 = ssub.s32 %s18, %s25
      %p137 = scmp.eq.s32.totalorder %s136, 0
      %s139 = sadd.s32 %s138, 1
      %s140 = scalar_select %p137, %s138, %s139
      %p143 = pneg %p137
      %p144 = scmp.eq.s32.totalorder %s18, 1
      %p145 = por %p143, %p144
      %p146 = scmp.ne.s32.totalorder %s138, %s141
      %p147 = scmp.eq.s32.totalorder %s18, 0
      %p148 = por %p146, %p147
      %p149 = scmp.ne.s32.totalorder %s138, %s141
      %p150 = scmp.eq.s32.totalorder %s23, 1
      %p151 = por %p149, %p150
      %p152 = scmp.ne.s32.totalorder %s141, %s142
      %p153 = scmp.eq.s32.totalorder %s23, 0
      %p154 = por %p152, %p153
      %p155 = scmp.ne.s32.totalorder %s141, %s142
      %p156 = scmp.eq.s32.totalorder %s24, 1
      %p157 = por %p155, %p156
      %p159 = scmp.ne.s32.totalorder %s142, %s158
      %p160 = scmp.eq.s32.totalorder %s24, 0
      %p161 = por %p159, %p160
      %p162 = scmp.le.s32.totalorder 1, %s18
      %p163 = scmp.lt.s32.totalorder %s18, 3
      %p164 = pnand %p162, %p163
      %p165 = pneg %p164
      // Predicated region
      $region9: #{tpu_custom_call.1} parent=5 // pred_check
        _
      $region10: #{tpu_custom_call.1} parent=5 // pred_check_branch
        %167 = sbr.rel (%p164) target = $region12
      $region11: #{tpu_custom_call.1} parent=5 // pred_region
        %s168 = ssub.s32 %s18, 1
        // Predicated region
        $region13: #{tpu_custom_call.1} parent=11 // pred_check
          %p169 = pneg %p65
        $region14: #{tpu_custom_call.1} parent=11 // pred_check_branch
          %171 = sbr.rel (%p169) target = $region16
        $region15: #{tpu_custom_call.1} parent=11 // pred_region
          %s173 = ssub.s32 8192, 8192
          %174 = vsyncadd [#allocation6], %s173
          %s175 = sshll.u32 [#allocation5], 4
          %s176 = int_to_ptr.vmem [resolvable:$true] %s175
          %181 = dma.hbm_to_vmem [thread:$0]  %s1, 8192, %s176, [#allocation6], 512, 512, 32
        $region16: #{tpu_custom_call.1} parent=11 // pred_fallthru
          _
        // Predicated region
        $region17: #{tpu_custom_call.1} parent=11 // pred_check
          %p182 = pneg %p86
        $region18: #{tpu_custom_call.1} parent=11 // pred_check_branch
          %184 = sbr.rel (%p182) target = $region20
        $region19: #{tpu_custom_call.1} parent=11 // pred_region
          _
        $region20: #{tpu_custom_call.1} parent=11 // pred_fallthru
          _
        // Predicated region
        $region21: #{tpu_custom_call.1} parent=11 // pred_check
          %p185 = pneg %p107
        $region22: #{tpu_custom_call.1} parent=11 // pred_check_branch
          %187 = sbr.rel (%p185) target = $region24
        $region23: #{tpu_custom_call.1} parent=11 // pred_region
          %s189 = ssub.s32 8192, 8192
          %190 = vsyncadd [#allocation6], %s189
          %s191 = sshll.u32 [#allocation7], 4
          %s192 = int_to_ptr.vmem [resolvable:$true] %s191
          %197 = dma.hbm_to_vmem [thread:$0]  %s3, 8192, %s192, [#allocation6], 128, 128, 8
        $region24: #{tpu_custom_call.1} parent=11 // pred_fallthru
          _
        // Predicated region
        $region25: #{tpu_custom_call.1} parent=11 // pred_check
          %p198 = pneg %p128
        $region26: #{tpu_custom_call.1} parent=11 // pred_check_branch
          %200 = sbr.rel (%p198) target = $region28
        $region27: #{tpu_custom_call.1} parent=11 // pred_region
          _
        $region28: #{tpu_custom_call.1} parent=11 // pred_fallthru
          _
      $region12: #{tpu_custom_call.1} parent=5 // pred_fallthru
        _
      %p201 = scmp.lt.s32.totalorder %s18, 2
      // Predicated region
      $region29: #{tpu_custom_call.1} parent=5 // pred_check
        %p202 = pneg %p201
      $region30: #{tpu_custom_call.1} parent=5 // pred_check_branch
        %204 = sbr.rel (%p202) target = $region32
      $region31: #{tpu_custom_call.1} parent=5 // pred_region
        // Predicated region
        $region33: #{tpu_custom_call.1} parent=31 // pred_check
          %p205 = pneg %p38
        $region34: #{tpu_custom_call.1} parent=31 // pred_check_branch
          %207 = sbr.rel (%p205) target = $region36
        $region35: #{tpu_custom_call.1} parent=31 // pred_region
          %s208 = sand.u32 %s28, 1
          %s209 = scalar_lea.sflag [#allocation3], %s208
          %s210 = sand.u32 %s28, 1
          %s211 = smul.addr %s210, 256
          %s212 = scalar_lea.vmem [#allocation2], %s211
          %s213 = smul.u32 32, %s18
          %s215 = ssub.s32 4096, 4096
          %216 = vsyncadd %s209, %s215
          %s217 = smul.addr %s213, 128
          %s218 = scalar_lea.hbm %s0, %s217
          %s219 = sshll.u32 %s212, 4
          %s220 = int_to_ptr.vmem [resolvable:$true] %s219
          %225 = dma.hbm_to_vmem [thread:$0]  %s218, 4096, %s220, %s209, 128, 128, 8
        $region36: #{tpu_custom_call.1} parent=31 // pred_fallthru
          _
      $region32: #{tpu_custom_call.1} parent=5 // pred_fallthru
        _
      %p226 = scmp.le.s32.totalorder 1, %s18
      %p227 = scmp.lt.s32.totalorder %s18, 3
      %p228 = pnand %p226, %p227
      %p229 = pneg %p228
      // Predicated region
      $region37: #{tpu_custom_call.1} parent=5 // pred_check
        _
      $region38: #{tpu_custom_call.1} parent=5 // pred_check_branch
        %231 = sbr.rel (%p228) target = $region40
      $region39: #{tpu_custom_call.1} parent=5 // pred_region
        %s232 = ssub.s32 %s18, 1
        %s233 = sand.u32 %s31, 1
        %s234 = scalar_lea.sflag [#allocation3], %s233
        %s235 = sand.u32 %s31, 1
        %s236 = smul.addr %s235, 256
        %s237 = scalar_lea.vmem [#allocation2], %s236
        // Predicated region
        $region41: #{tpu_custom_call.1} parent=39 // pred_check
          %p238 = pneg %p44
        $region42: #{tpu_custom_call.1} parent=39 // pred_check_branch
          %240 = sbr.rel (%p238) target = $region44
        $region43: #{tpu_custom_call.1} parent=39 // pred_region
          %241 = dma.done %s234, 4096
        $region44: #{tpu_custom_call.1} parent=39 // pred_fallthru
          _
        // Predicated region
        $region45: #{tpu_custom_call.1} parent=39 // pred_check
          %p242 = pneg %p65
        $region46: #{tpu_custom_call.1} parent=39 // pred_check_branch
          %244 = sbr.rel (%p242) target = $region48
        $region47: #{tpu_custom_call.1} parent=39 // pred_region
          %245 = dma.done [#allocation6], 8192
        $region48: #{tpu_custom_call.1} parent=39 // pred_fallthru
          _
        // Predicated region
        $region49: #{tpu_custom_call.1} parent=39 // pred_check
          %p246 = pneg %p107
        $region50: #{tpu_custom_call.1} parent=39 // pred_check_branch
          %248 = sbr.rel (%p246) target = $region52
        $region51: #{tpu_custom_call.1} parent=39 // pred_region
          %249 = dma.done [#allocation6], 8192
        $region52: #{tpu_custom_call.1} parent=39 // pred_fallthru
          _
        %s250 = sand.u32 %s31, 1
        %s251 = scalar_lea.sflag [#allocation3], %s250
        %s252 = sand.u32 %s31, 1
        %s253 = smul.addr %s252, 256
        %s254 = scalar_lea.vmem [#allocation2], %s253
        %p255 = pneg %p44
        %p256 = pneg %p41
        %p257 = pneg %p65
        %p258 = pneg %p62
        %p259 = pneg %p86
        %p260 = pneg %p83
        %p261 = pneg %p107
        %p262 = pneg %p104
        %p263 = pneg %p128
        %p264 = pneg %p125
        %p265 = pneg %p154
        %p266 = pneg %p151
        %s267 = sand.u32 %s141, 1
        %s268 = scalar_lea.sflag [#allocation4], %s267
        %s269 = sand.u32 %s141, 1
        %s270 = smul.addr %s269, 256
        %s271 = scalar_lea.vmem [#allocation8], %s270
        %s272 = smul.u32 32, %s23
        %s273 = smul.u32 32, %s23
        %v274 = vld [vmem:[%s237] sm:$0xff]
        %v275 = vld [vmem:[%s237 + $0x8] sm:$0xff]
        %v276 = vld [vmem:[%s237 + $0x10] sm:$0xff]
        %v277 = vld [vmem:[%s237 + $0x18] sm:$0xff]
        %v278 = vld [vmem:[%s237 + $0x20] sm:$0xff]
        %v279 = vld [vmem:[%s237 + $0x28] sm:$0xff]
        %v280 = vld [vmem:[%s237 + $0x30] sm:$0xff]
        %v281 = vld [vmem:[%s237 + $0x38] sm:$0xff]
        %v282 = vld [vmem:[%s237 + $0x40] sm:$0xff]
        %v283 = vld [vmem:[%s237 + $0x48] sm:$0xff]
        %v284 = vld [vmem:[%s237 + $0x50] sm:$0xff]
        %v285 = vld [vmem:[%s237 + $0x58] sm:$0xff]
        %v286 = vld [vmem:[%s237 + $0x60] sm:$0xff]
        %v287 = vld [vmem:[%s237 + $0x68] sm:$0xff]
        %v288 = vld [vmem:[%s237 + $0x70] sm:$0xff]
        %v289 = vld [vmem:[%s237 + $0x78] sm:$0xff]
        %v290 = vld [vmem:[%s237 + $0x80] sm:$0xff]
        %v291 = vld [vmem:[%s237 + $0x88] sm:$0xff]
        %v292 = vld [vmem:[%s237 + $0x90] sm:$0xff]
        %v293 = vld [vmem:[%s237 + $0x98] sm:$0xff]
        %v294 = vld [vmem:[%s237 + $0xa0] sm:$0xff]
        %v295 = vld [vmem:[%s237 + $0xa8] sm:$0xff]
        %v296 = vld [vmem:[%s237 + $0xb0] sm:$0xff]
        %v297 = vld [vmem:[%s237 + $0xb8] sm:$0xff]
        %v298 = vld [vmem:[%s237 + $0xc0] sm:$0xff]
        %v299 = vld [vmem:[%s237 + $0xc8] sm:$0xff]
        %v300 = vld [vmem:[%s237 + $0xd0] sm:$0xff]
        %v301 = vld [vmem:[%s237 + $0xd8] sm:$0xff]
        %v302 = vld [vmem:[%s237 + $0xe0] sm:$0xff]
        %v303 = vld [vmem:[%s237 + $0xe8] sm:$0xff]
        %v304 = vld [vmem:[%s237 + $0xf0] sm:$0xff]
        %v305 = vld [vmem:[%s237 + $0xf8] sm:$0xff]
        %v306 = vld [vmem:[#allocation5] sm:$0xff]
        %v307 = vld [vmem:[#allocation5 + $0x8] sm:$0xff]
        %v308 = vld [vmem:[#allocation5 + $0x10] sm:$0xff]
        %v309 = vld [vmem:[#allocation5 + $0x18] sm:$0xff]
        %v310 = vld [vmem:[#allocation5 + $0x20] sm:$0xff]
        %v311 = vld [vmem:[#allocation5 + $0x28] sm:$0xff]
        %v312 = vld [vmem:[#allocation5 + $0x30] sm:$0xff]
        %v313 = vld [vmem:[#allocation5 + $0x38] sm:$0xff]
        %v314 = vld [vmem:[#allocation5 + $0x40] sm:$0xff]
        %v315 = vld [vmem:[#allocation5 + $0x48] sm:$0xff]
        %v316 = vld [vmem:[#allocation5 + $0x50] sm:$0xff]
        %v317 = vld [vmem:[#allocation5 + $0x58] sm:$0xff]
        %v318 = vld [vmem:[#allocation5 + $0x60] sm:$0xff]
        %v319 = vld [vmem:[#allocation5 + $0x68] sm:$0xff]
        %v320 = vld [vmem:[#allocation5 + $0x70] sm:$0xff]
        %v321 = vld [vmem:[#allocation5 + $0x78] sm:$0xff]
        %v322 = vld [vmem:[#allocation5 + $0x80] sm:$0xff]
        %v323 = vld [vmem:[#allocation5 + $0x88] sm:$0xff]
        %v324 = vld [vmem:[#allocation5 + $0x90] sm:$0xff]
        %v325 = vld [vmem:[#allocation5 + $0x98] sm:$0xff]
        %v326 = vld [vmem:[#allocation5 + $0xa0] sm:$0xff]
        %v327 = vld [vmem:[#allocation5 + $0xa8] sm:$0xff]
        %v328 = vld [vmem:[#allocation5 + $0xb0] sm:$0xff]
        %v329 = vld [vmem:[#allocation5 + $0xb8] sm:$0xff]
        %v330 = vld [vmem:[#allocation5 + $0xc0] sm:$0xff]
        %v331 = vld [vmem:[#allocation5 + $0xc8] sm:$0xff]
        %v332 = vld [vmem:[#allocation5 + $0xd0] sm:$0xff]
        %v333 = vld [vmem:[#allocation5 + $0xd8] sm:$0xff]
        %v334 = vld [vmem:[#allocation5 + $0xe0] sm:$0xff]
        %v335 = vld [vmem:[#allocation5 + $0xe8] sm:$0xff]
        %v336 = vld [vmem:[#allocation5 + $0xf0] sm:$0xff]
        %v337 = vld [vmem:[#allocation5 + $0xf8] sm:$0xff]
        %v338 = vld [vmem:[#allocation5 + $0x100] sm:$0xff]
        %v339 = vld [vmem:[#allocation5 + $0x108] sm:$0xff]
        %v340 = vld [vmem:[#allocation5 + $0x110] sm:$0xff]
        %v341 = vld [vmem:[#allocation5 + $0x118] sm:$0xff]
        %v342 = vld [vmem:[#allocation5 + $0x120] sm:$0xff]
        %v343 = vld [vmem:[#allocation5 + $0x128] sm:$0xff]
        %v344 = vld [vmem:[#allocation5 + $0x130] sm:$0xff]
        %v345 = vld [vmem:[#allocation5 + $0x138] sm:$0xff]
        %v346 = vld [vmem:[#allocation5 + $0x140] sm:$0xff]
        %v347 = vld [vmem:[#allocation5 + $0x148] sm:$0xff]
        %v348 = vld [vmem:[#allocation5 + $0x150] sm:$0xff]
        %v349 = vld [vmem:[#allocation5 + $0x158] sm:$0xff]
        %v350 = vld [vmem:[#allocation5 + $0x160] sm:$0xff]
        %v351 = vld [vmem:[#allocation5 + $0x168] sm:$0xff]
        %v352 = vld [vmem:[#allocation5 + $0x170] sm:$0xff]
        %v353 = vld [vmem:[#allocation5 + $0x178] sm:$0xff]
        %v354 = vld [vmem:[#allocation5 + $0x180] sm:$0xff]
        %v355 = vld [vmem:[#allocation5 + $0x188] sm:$0xff]
        %v356 = vld [vmem:[#allocation5 + $0x190] sm:$0xff]
        %v357 = vld [vmem:[#allocation5 + $0x198] sm:$0xff]
        %v358 = vld [vmem:[#allocation5 + $0x1a0] sm:$0xff]
        %v359 = vld [vmem:[#allocation5 + $0x1a8] sm:$0xff]
        %v360 = vld [vmem:[#allocation5 + $0x1b0] sm:$0xff]
        %v361 = vld [vmem:[#allocation5 + $0x1b8] sm:$0xff]
        %v362 = vld [vmem:[#allocation5 + $0x1c0] sm:$0xff]
        %v363 = vld [vmem:[#allocation5 + $0x1c8] sm:$0xff]
        %v364 = vld [vmem:[#allocation5 + $0x1d0] sm:$0xff]
        %v365 = vld [vmem:[#allocation5 + $0x1d8] sm:$0xff]
        %v366 = vld [vmem:[#allocation5 + $0x1e0] sm:$0xff]
        %v367 = vld [vmem:[#allocation5 + $0x1e8] sm:$0xff]
        %v368 = vld [vmem:[#allocation5 + $0x1f0] sm:$0xff]
        %v369 = vld [vmem:[#allocation5 + $0x1f8] sm:$0xff]
        %v370 = vld [vmem:[%s2] sm:$0xf]
        %v372 = vlaneseq
        %v373 = vshrl.u32 %v372, 7
        %v374 = vsub.s32 0, %v373
        %v375 = vrot.slane %v370, %v374
        %v376 = vlaneseq
        %v377 = vshrl.u32 %v376, 7
        %v378 = vsub.s32 1, %v377
        %v379 = vrot.slane %v370, %v378
        %v380 = vlaneseq
        %v381 = vshrl.u32 %v380, 7
        %v382 = vsub.s32 2, %v381
        %v383 = vrot.slane %v370, %v382
        %v384 = vlaneseq
        %v385 = vshrl.u32 %v384, 7
        %v386 = vsub.s32 3, %v385
        %v387 = vrot.slane %v370, %v386
        %392 = vmatprep.subr.mxu0 %v307
        %393 = vmatpush1.msra.mxu0 %v306
        %394 = vmatprep.subr.mxu0 %v311
        %395 = vmatpush1.msra.mxu0 %v310
        %396 = vmatprep.subr.mxu0 %v315
        %397 = vmatpush1.msra.mxu0 %v314
        %398 = vmatprep.subr.mxu0 %v319
        %399 = vmatpush1.msra.mxu0 %v318
        %400 = vmatprep.subr.mxu0 %v323
        %401 = vmatpush1.msra.mxu0 %v322
        %402 = vmatprep.subr.mxu0 %v327
        %403 = vmatpush1.msra.mxu0 %v326
        %404 = vmatprep.subr.mxu0 %v331
        %405 = vmatpush1.msra.mxu0 %v330
        %406 = vmatprep.subr.mxu0 %v335
        %407 = vmatpush1.msra.mxu0 %v334
        %408 = vmatprep.subr.mxu0 %v339
        %409 = vmatpush1.msra.mxu0 %v338
        %410 = vmatprep.subr.mxu0 %v343
        %411 = vmatpush1.msra.mxu0 %v342
        %412 = vmatprep.subr.mxu0 %v347
        %413 = vmatpush1.msra.mxu0 %v346
        %414 = vmatprep.subr.mxu0 %v351
        %415 = vmatpush1.msra.mxu0 %v350
        %416 = vmatprep.subr.mxu0 %v355
        %417 = vmatpush1.msra.mxu0 %v354
        %418 = vmatprep.subr.mxu0 %v359
        %419 = vmatpush1.msra.mxu0 %v358
        %420 = vmatprep.subr.mxu0 %v363
        %421 = vmatpush1.msra.mxu0 %v362
        %422 = vmatprep.subr.mxu0 %v367
        %423 = vmatpush1.msra.mxu0 %v366
        %424 = vmatprep.subr.mxu0 0.0
        %425 = vmatpush1.msra.mxu0 0.0
        %426 = vmatprep.subr.mxu0 0.0
        %427 = vmatpush1.msra.mxu0 0.0
        %428 = vmatprep.subr.mxu0 0.0
        %429 = vmatpush1.msra.mxu0 0.0
        %430 = vmatprep.subr.mxu0 0.0
        %431 = vmatpush1.msra.mxu0 0.0
        %432 = vmatprep.subr.mxu0 0.0
        %433 = vmatpush1.msra.mxu0 0.0
        %434 = vmatprep.subr.mxu0 0.0
        %435 = vmatpush1.msra.mxu0 0.0
        %436 = vmatprep.subr.mxu0 0.0
        %437 = vmatpush1.msra.mxu0 0.0
        %438 = vmatprep.subr.mxu0 0.0
        %439 = vmatpush1.msra.mxu0 0.0
        %440 = vmatprep.subr.mxu0 0.0
        %441 = vmatpush1.msra.mxu0 0.0
        %442 = vmatprep.subr.mxu0 0.0
        %443 = vmatpush1.msra.mxu0 0.0
        %444 = vmatprep.subr.mxu0 0.0
        %445 = vmatpush1.msra.mxu0 0.0
        %446 = vmatprep.subr.mxu0 0.0
        %447 = vmatpush1.msra.mxu0 0.0
        %448 = vmatprep.subr.mxu0 0.0
        %449 = vmatpush1.msra.mxu0 0.0
        %450 = vmatprep.subr.mxu0 0.0
        %451 = vmatpush1.msra.mxu0 0.0
        %452 = vmatprep.subr.mxu0 0.0
        %453 = vmatpush1.msra.mxu0 0.0
        %454 = vmatprep.subr.mxu0 0.0
        %455 = vmatpush1.msra.mxu0 0.0
        %456 = vmatprep.mubr.f32.mxu0 0.0
        %457 = vmatmul.mubr.f32.gmra.mrb[0].mxu0 %v274
        %v458 = vpop.f32.mrb[0].mxu0
        %v459 = vadd.f32 %v375, %v458
        %v460 = vpop.f32.mrb[0].mxu0
        %v461 = vadd.f32 %v379, %v460
        %462 = vmatprep.mubr.f32.mxu0 0.0
        %463 = vmatmul.mubr.f32.gmra.mrb[0].mxu0 %v275
        %v464 = vpop.f32.mrb[0].mxu0
        %v465 = vadd.f32 %v375, %v464
        %v466 = vpop.f32.mrb[0].mxu0
        %v467 = vadd.f32 %v379, %v466
        %468 = vmatprep.mubr.f32.mxu0 0.0
        %469 = vmatmul.mubr.f32.gmra.mrb[0].mxu0 %v276
        %v470 = vpop.f32.mrb[0].mxu0
        %v471 = vadd.f32 %v375, %v470
        %v472 = vpop.f32.mrb[0].mxu0
        %v473 = vadd.f32 %v379, %v472
        %474 = vmatprep.mubr.f32.mxu0 0.0
        %475 = vmatmul.mubr.f32.gmra.mrb[0].mxu0 %v277
        %v476 = vpop.f32.mrb[0].mxu0
        %v477 = vadd.f32 %v375, %v476
        %v478 = vpop.f32.mrb[0].mxu0
        %v479 = vadd.f32 %v379, %v478
        %480 = vmatprep.mubr.f32.mxu0 0.0
        %481 = vmatmul.mubr.f32.gmra.mrb[0].mxu0 %v278
        %v482 = vpop.f32.mrb[0].mxu0
        %v483 = vadd.f32 %v375, %v482
        %v484 = vpop.f32.mrb[0].mxu0
        %v485 = vadd.f32 %v379, %v484
        %486 = vmatprep.mubr.f32.mxu0 0.0
        %487 = vmatmul.mubr.f32.gmra.mrb[0].mxu0 %v279
        %v488 = vpop.f32.mrb[0].mxu0
        %v489 = vadd.f32 %v375, %v488
        %v490 = vpop.f32.mrb[0].mxu0
        %v491 = vadd.f32 %v379, %v490
        %492 = vmatprep.mubr.f32.mxu0 0.0
        %493 = vmatmul.mubr.f32.gmra.mrb[0].mxu0 %v280
        %v494 = vpop.f32.mrb[0].mxu0
        %v495 = vadd.f32 %v375, %v494
        %v496 = vpop.f32.mrb[0].mxu0
        %v497 = vadd.f32 %v379, %v496
        %498 = vmatprep.mubr.f32.mxu0 0.0
        %499 = vmatmul.mubr.f32.gmra.mrb[0].mxu0 %v281
        %v500 = vpop.f32.mrb[0].mxu0
        %v501 = vadd.f32 %v375, %v500
        %v502 = vpop.f32.mrb[0].mxu0
        %v503 = vadd.f32 %v379, %v502
        %504 = vmatprep.mubr.f32.mxu0 0.0
        %505 = vmatmul.mubr.f32.gmra.mrb[0].mxu0 %v282
        %v506 = vpop.f32.mrb[0].mxu0
        %v507 = vadd.f32 %v375, %v506
        %v508 = vpop.f32.mrb[0].mxu0
        %v509 = vadd.f32 %v379, %v508
        %510 = vmatprep.mubr.f32.mxu0 0.0
        %511 = vmatmul.mubr.f32.gmra.mrb[0].mxu0 %v283
        %v512 = vpop.f32.mrb[0].mxu0
        %v513 = vadd.f32 %v375, %v512
        %v514 = vpop.f32.mrb[0].mxu0
        %v515 = vadd.f32 %v379, %v514
        %516 = vmatprep.mubr.f32.mxu0 0.0
        %517 = vmatmul.mubr.f32.gmra.mrb[0].mxu0 %v284
        %v518 = vpop.f32.mrb[0].mxu0
        %v519 = vadd.f32 %v375, %v518
        %v520 = vpop.f32.mrb[0].mxu0
        %v521 = vadd.f32 %v379, %v520
        %522 = vmatprep.mubr.f32.mxu0 0.0
        %523 = vmatmul.mubr.f32.gmra.mrb[0].mxu0 %v285
        %v524 = vpop.f32.mrb[0].mxu0
        %v525 = vadd.f32 %v375, %v524
        %v526 = vpop.f32.mrb[0].mxu0
        %v527 = vadd.f32 %v379, %v526
        %528 = vmatprep.mubr.f32.mxu0 0.0
        %529 = vmatmul.mubr.f32.gmra.mrb[0].mxu0 %v286
        %v530 = vpop.f32.mrb[0].mxu0
        %v531 = vadd.f32 %v375, %v530
        %v532 = vpop.f32.mrb[0].mxu0
        %v533 = vadd.f32 %v379, %v532
        %534 = vmatprep.mubr.f32.mxu0 0.0
        %535 = vmatmul.mubr.f32.gmra.mrb[0].mxu0 %v287
        %v536 = vpop.f32.mrb[0].mxu0
        %v537 = vadd.f32 %v375, %v536
        %v538 = vpop.f32.mrb[0].mxu0
        %v539 = vadd.f32 %v379, %v538
        %540 = vmatprep.mubr.f32.mxu0 0.0
        %541 = vmatmul.mubr.f32.gmra.mrb[0].mxu0 %v288
        %v542 = vpop.f32.mrb[0].mxu0
        %v543 = vadd.f32 %v375, %v542
        %v544 = vpop.f32.mrb[0].mxu0
        %v545 = vadd.f32 %v379, %v544
        %546 = vmatprep.mubr.f32.mxu0 0.0
        %547 = vmatmul.mubr.f32.gmra.mrb[0].mxu0 %v289
        %v548 = vpop.f32.mrb[0].mxu0
        %v549 = vadd.f32 %v375, %v548
        %v550 = vpop.f32.mrb[0].mxu0
        %v551 = vadd.f32 %v379, %v550
        %552 = vmatprep.mubr.f32.mxu0 0.0
        %553 = vmatmul.mubr.f32.gmra.mrb[0].mxu0 %v290
        %v554 = vpop.f32.mrb[0].mxu0
        %v555 = vadd.f32 %v375, %v554
        %v556 = vpop.f32.mrb[0].mxu0
        %v557 = vadd.f32 %v379, %v556
        %558 = vmatprep.mubr.f32.mxu0 0.0
        %559 = vmatmul.mubr.f32.gmra.mrb[0].mxu0 %v291
        %v560 = vpop.f32.mrb[0].mxu0
        %v561 = vadd.f32 %v375, %v560
        %v562 = vpop.f32.mrb[0].mxu0
        %v563 = vadd.f32 %v379, %v562
        %564 = vmatprep.mubr.f32.mxu0 0.0
        %565 = vmatmul.mubr.f32.gmra.mrb[0].mxu0 %v292
        %v566 = vpop.f32.mrb[0].mxu0
        %v567 = vadd.f32 %v375, %v566
        %v568 = vpop.f32.mrb[0].mxu0
        %v569 = vadd.f32 %v379, %v568
        %570 = vmatprep.mubr.f32.mxu0 0.0
        %571 = vmatmul.mubr.f32.gmra.mrb[0].mxu0 %v293
        %v572 = vpop.f32.mrb[0].mxu0
        %v573 = vadd.f32 %v375, %v572
        %v574 = vpop.f32.mrb[0].mxu0
        %v575 = vadd.f32 %v379, %v574
        %576 = vmatprep.mubr.f32.mxu0 0.0
        %577 = vmatmul.mubr.f32.gmra.mrb[0].mxu0 %v294
        %v578 = vpop.f32.mrb[0].mxu0
        %v579 = vadd.f32 %v375, %v578
        %v580 = vpop.f32.mrb[0].mxu0
        %v581 = vadd.f32 %v379, %v580
        %582 = vmatprep.mubr.f32.mxu0 0.0
        %583 = vmatmul.mubr.f32.gmra.mrb[0].mxu0 %v295
        %v584 = vpop.f32.mrb[0].mxu0
        %v585 = vadd.f32 %v375, %v584
        %v586 = vpop.f32.mrb[0].mxu0
        %v587 = vadd.f32 %v379, %v586
        %588 = vmatprep.mubr.f32.mxu0 0.0
        %589 = vmatmul.mubr.f32.gmra.mrb[0].mxu0 %v296
        %v590 = vpop.f32.mrb[0].mxu0
        %v591 = vadd.f32 %v375, %v590
        %v592 = vpop.f32.mrb[0].mxu0
        %v593 = vadd.f32 %v379, %v592
        %594 = vmatprep.mubr.f32.mxu0 0.0
        %595 = vmatmul.mubr.f32.gmra.mrb[0].mxu0 %v297
        %v596 = vpop.f32.mrb[0].mxu0
        %v597 = vadd.f32 %v375, %v596
        %v598 = vpop.f32.mrb[0].mxu0
        %v599 = vadd.f32 %v379, %v598
        %600 = vmatprep.mubr.f32.mxu0 0.0
        %601 = vmatmul.mubr.f32.gmra.mrb[0].mxu0 %v298
        %v602 = vpop.f32.mrb[0].mxu0
        %v603 = vadd.f32 %v375, %v602
        %v604 = vpop.f32.mrb[0].mxu0
        %v605 = vadd.f32 %v379, %v604
        %606 = vmatprep.mubr.f32.mxu0 0.0
        %607 = vmatmul.mubr.f32.gmra.mrb[0].mxu0 %v299
        %v608 = vpop.f32.mrb[0].mxu0
        %v609 = vadd.f32 %v375, %v608
        %v610 = vpop.f32.mrb[0].mxu0
        %v611 = vadd.f32 %v379, %v610
        %612 = vmatprep.mubr.f32.mxu0 0.0
        %613 = vmatmul.mubr.f32.gmra.mrb[0].mxu0 %v300
        %v614 = vpop.f32.mrb[0].mxu0
        %v615 = vadd.f32 %v375, %v614
        %v616 = vpop.f32.mrb[0].mxu0
        %v617 = vadd.f32 %v379, %v616
        %618 = vmatprep.mubr.f32.mxu0 0.0
        %619 = vmatmul.mubr.f32.gmra.mrb[0].mxu0 %v301
        %v620 = vpop.f32.mrb[0].mxu0
        %v621 = vadd.f32 %v375, %v620
        %v622 = vpop.f32.mrb[0].mxu0
        %v623 = vadd.f32 %v379, %v622
        %624 = vmatprep.mubr.f32.mxu0 0.0
        %625 = vmatmul.mubr.f32.gmra.mrb[0].mxu0 %v302
        %v626 = vpop.f32.mrb[0].mxu0
        %v627 = vadd.f32 %v375, %v626
        %v628 = vpop.f32.mrb[0].mxu0
        %v629 = vadd.f32 %v379, %v628
        %630 = vmatprep.mubr.f32.mxu0 0.0
        %631 = vmatmul.mubr.f32.gmra.mrb[0].mxu0 %v303
        %v632 = vpop.f32.mrb[0].mxu0
        %v633 = vadd.f32 %v375, %v632
        %v634 = vpop.f32.mrb[0].mxu0
        %v635 = vadd.f32 %v379, %v634
        %636 = vmatprep.mubr.f32.mxu0 0.0
        %637 = vmatmul.mubr.f32.gmra.mrb[0].mxu0 %v304
        %v638 = vpop.f32.mrb[0].mxu0
        %v639 = vadd.f32 %v375, %v638
        %v640 = vpop.f32.mrb[0].mxu0
        %v641 = vadd.f32 %v379, %v640
        %642 = vmatprep.mubr.f32.mxu0 0.0
        %643 = vmatmul.mubr.f32.gmra.mrb[0].mxu0 %v305
        %v644 = vpop.f32.mrb[0].mxu0
        %v645 = vadd.f32 %v375, %v644
        %v646 = vpop.f32.mrb[0].mxu0
        %v647 = vadd.f32 %v379, %v646
        %648 = vdwg.mxu0
        %649 = vmatprep.subr.mxu0 %v309
        %650 = vmatpush1.msra.mxu0 %v308
        %651 = vmatprep.subr.mxu0 %v313
        %652 = vmatpush1.msra.mxu0 %v312
        %653 = vmatprep.subr.mxu0 %v317
        %654 = vmatpush1.msra.mxu0 %v316
        %655 = vmatprep.subr.mxu0 %v321
        %656 = vmatpush1.msra.mxu0 %v320
        %657 = vmatprep.subr.mxu0 %v325
        %658 = vmatpush1.msra.mxu0 %v324
        %659 = vmatprep.subr.mxu0 %v329
        %660 = vmatpush1.msra.mxu0 %v328
        %661 = vmatprep.subr.mxu0 %v333
        %662 = vmatpush1.msra.mxu0 %v332
        %663 = vmatprep.subr.mxu0 %v337
        %664 = vmatpush1.msra.mxu0 %v336
        %665 = vmatprep.subr.mxu0 %v341
        %666 = vmatpush1.msra.mxu0 %v340
        %667 = vmatprep.subr.mxu0 %v345
        %668 = vmatpush1.msra.mxu0 %v344
        %669 = vmatprep.subr.mxu0 %v349
        %670 = vmatpush1.msra.mxu0 %v348
        %671 = vmatprep.subr.mxu0 %v353
        %672 = vmatpush1.msra.mxu0 %v352
        %673 = vmatprep.subr.mxu0 %v357
        %674 = vmatpush1.msra.mxu0 %v356
        %675 = vmatprep.subr.mxu0 %v361
        %676 = vmatpush1.msra.mxu0 %v360
        %677 = vmatprep.subr.mxu0 %v365
        %678 = vmatpush1.msra.mxu0 %v364
        %679 = vmatprep.subr.mxu0 %v369
        %680 = vmatpush1.msra.mxu0 %v368
        %681 = vmatprep.subr.mxu0 0.0
        %682 = vmatpush1.msra.mxu0 0.0
        %683 = vmatprep.subr.mxu0 0.0
        %684 = vmatpush1.msra.mxu0 0.0
        %685 = vmatprep.subr.mxu0 0.0
        %686 = vmatpush1.msra.mxu0 0.0
        %687 = vmatprep.subr.mxu0 0.0
        %688 = vmatpush1.msra.mxu0 0.0
        %689 = vmatprep.subr.mxu0 0.0
        %690 = vmatpush1.msra.mxu0 0.0
        %691 = vmatprep.subr.mxu0 0.0
        %692 = vmatpush1.msra.mxu0 0.0
        %693 = vmatprep.subr.mxu0 0.0
        %694 = vmatpush1.msra.mxu0 0.0
        %695 = vmatprep.subr.mxu0 0.0
        %696 = vmatpush1.msra.mxu0 0.0
        %697 = vmatprep.subr.mxu0 0.0
        %698 = vmatpush1.msra.mxu0 0.0
        %699 = vmatprep.subr.mxu0 0.0
        %700 = vmatpush1.msra.mxu0 0.0
        %701 = vmatprep.subr.mxu0 0.0
        %702 = vmatpush1.msra.mxu0 0.0
        %703 = vmatprep.subr.mxu0 0.0
        %704 = vmatpush1.msra.mxu0 0.0
        %705 = vmatprep.subr.mxu0 0.0
        %706 = vmatpush1.msra.mxu0 0.0
        %707 = vmatprep.subr.mxu0 0.0
        %708 = vmatpush1.msra.mxu0 0.0
        %709 = vmatprep.subr.mxu0 0.0
        %710 = vmatpush1.msra.mxu0 0.0
        %711 = vmatprep.subr.mxu0 0.0
        %712 = vmatpush1.msra.mxu0 0.0
        %713 = vmatprep.mubr.f32.mxu0 0.0
        %714 = vmatmul.mubr.f32.gmra.mrb[0].mxu0 %v274
        %v715 = vpop.f32.mrb[0].mxu0
        %v716 = vadd.f32 %v383, %v715
        %v717 = vpop.f32.mrb[0].mxu0
        %v718 = vadd.f32 %v387, %v717
        %719 = vmatprep.mubr.f32.mxu0 0.0
        %720 = vmatmul.mubr.f32.gmra.mrb[0].mxu0 %v275
        %v721 = vpop.f32.mrb[0].mxu0
        %v722 = vadd.f32 %v383, %v721
        %v723 = vpop.f32.mrb[0].mxu0
        %v724 = vadd.f32 %v387, %v723
        %725 = vmatprep.mubr.f32.mxu0 0.0
        %726 = vmatmul.mubr.f32.gmra.mrb[0].mxu0 %v276
        %v727 = vpop.f32.mrb[0].mxu0
        %v728 = vadd.f32 %v383, %v727
        %v729 = vpop.f32.mrb[0].mxu0
        %v730 = vadd.f32 %v387, %v729
        %731 = vmatprep.mubr.f32.mxu0 0.0
        %732 = vmatmul.mubr.f32.gmra.mrb[0].mxu0 %v277
        %v733 = vpop.f32.mrb[0].mxu0
        %v734 = vadd.f32 %v383, %v733
        %v735 = vpop.f32.mrb[0].mxu0
        %v736 = vadd.f32 %v387, %v735
        %737 = vmatprep.mubr.f32.mxu0 0.0
        %738 = vmatmul.mubr.f32.gmra.mrb[0].mxu0 %v278
        %v739 = vpop.f32.mrb[0].mxu0
        %v740 = vadd.f32 %v383, %v739
        %v741 = vpop.f32.mrb[0].mxu0
        %v742 = vadd.f32 %v387, %v741
        %743 = vmatprep.mubr.f32.mxu0 0.0
        %744 = vmatmul.mubr.f32.gmra.mrb[0].mxu0 %v279
        %v745 = vpop.f32.mrb[0].mxu0
        %v746 = vadd.f32 %v383, %v745
        %v747 = vpop.f32.mrb[0].mxu0
        %v748 = vadd.f32 %v387, %v747
        %749 = vmatprep.mubr.f32.mxu0 0.0
        %750 = vmatmul.mubr.f32.gmra.mrb[0].mxu0 %v280
        %v751 = vpop.f32.mrb[0].mxu0
        %v752 = vadd.f32 %v383, %v751
        %v753 = vpop.f32.mrb[0].mxu0
        %v754 = vadd.f32 %v387, %v753
        %755 = vmatprep.mubr.f32.mxu0 0.0
        %756 = vmatmul.mubr.f32.gmra.mrb[0].mxu0 %v281
        %v757 = vpop.f32.mrb[0].mxu0
        %v758 = vadd.f32 %v383, %v757
        %v759 = vpop.f32.mrb[0].mxu0
        %v760 = vadd.f32 %v387, %v759
        %761 = vmatprep.mubr.f32.mxu0 0.0
        %762 = vmatmul.mubr.f32.gmra.mrb[0].mxu0 %v282
        %v763 = vpop.f32.mrb[0].mxu0
        %v764 = vadd.f32 %v383, %v763
        %v765 = vpop.f32.mrb[0].mxu0
        %v766 = vadd.f32 %v387, %v765
        %767 = vmatprep.mubr.f32.mxu0 0.0
        %768 = vmatmul.mubr.f32.gmra.mrb[0].mxu0 %v283
        %v769 = vpop.f32.mrb[0].mxu0
        %v770 = vadd.f32 %v383, %v769
        %v771 = vpop.f32.mrb[0].mxu0
        %v772 = vadd.f32 %v387, %v771
        %773 = vmatprep.mubr.f32.mxu0 0.0
        %774 = vmatmul.mubr.f32.gmra.mrb[0].mxu0 %v284
        %v775 = vpop.f32.mrb[0].mxu0
        %v776 = vadd.f32 %v383, %v775
        %v777 = vpop.f32.mrb[0].mxu0
        %v778 = vadd.f32 %v387, %v777
        %779 = vmatprep.mubr.f32.mxu0 0.0
        %780 = vmatmul.mubr.f32.gmra.mrb[0].mxu0 %v285
        %v781 = vpop.f32.mrb[0].mxu0
        %v782 = vadd.f32 %v383, %v781
        %v783 = vpop.f32.mrb[0].mxu0
        %v784 = vadd.f32 %v387, %v783
        %785 = vmatprep.mubr.f32.mxu0 0.0
        %786 = vmatmul.mubr.f32.gmra.mrb[0].mxu0 %v286
        %v787 = vpop.f32.mrb[0].mxu0
        %v788 = vadd.f32 %v383, %v787
        %v789 = vpop.f32.mrb[0].mxu0
        %v790 = vadd.f32 %v387, %v789
        %791 = vmatprep.mubr.f32.mxu0 0.0
        %792 = vmatmul.mubr.f32.gmra.mrb[0].mxu0 %v287
        %v793 = vpop.f32.mrb[0].mxu0
        %v794 = vadd.f32 %v383, %v793
        %v795 = vpop.f32.mrb[0].mxu0
        %v796 = vadd.f32 %v387, %v795
        %797 = vmatprep.mubr.f32.mxu0 0.0
        %798 = vmatmul.mubr.f32.gmra.mrb[0].mxu0 %v288
        %v799 = vpop.f32.mrb[0].mxu0
        %v800 = vadd.f32 %v383, %v799
        %v801 = vpop.f32.mrb[0].mxu0
        %v802 = vadd.f32 %v387, %v801
        %803 = vmatprep.mubr.f32.mxu0 0.0
        %804 = vmatmul.mubr.f32.gmra.mrb[0].mxu0 %v289
        %v805 = vpop.f32.mrb[0].mxu0
        %v806 = vadd.f32 %v383, %v805
        %v807 = vpop.f32.mrb[0].mxu0
        %v808 = vadd.f32 %v387, %v807
        %809 = vmatprep.mubr.f32.mxu0 0.0
        %810 = vmatmul.mubr.f32.gmra.mrb[0].mxu0 %v290
        %v811 = vpop.f32.mrb[0].mxu0
        %v812 = vadd.f32 %v383, %v811
        %v813 = vpop.f32.mrb[0].mxu0
        %v814 = vadd.f32 %v387, %v813
        %815 = vmatprep.mubr.f32.mxu0 0.0
        %816 = vmatmul.mubr.f32.gmra.mrb[0].mxu0 %v291
        %v817 = vpop.f32.mrb[0].mxu0
        %v818 = vadd.f32 %v383, %v817
        %v819 = vpop.f32.mrb[0].mxu0
        %v820 = vadd.f32 %v387, %v819
        %821 = vmatprep.mubr.f32.mxu0 0.0
        %822 = vmatmul.mubr.f32.gmra.mrb[0].mxu0 %v292
        %v823 = vpop.f32.mrb[0].mxu0
        %v824 = vadd.f32 %v383, %v823
        %v825 = vpop.f32.mrb[0].mxu0
        %v826 = vadd.f32 %v387, %v825
        %827 = vmatprep.mubr.f32.mxu0 0.0
        %828 = vmatmul.mubr.f32.gmra.mrb[0].mxu0 %v293
        %v829 = vpop.f32.mrb[0].mxu0
        %v830 = vadd.f32 %v383, %v829
        %v831 = vpop.f32.mrb[0].mxu0
        %v832 = vadd.f32 %v387, %v831
        %833 = vmatprep.mubr.f32.mxu0 0.0
        %834 = vmatmul.mubr.f32.gmra.mrb[0].mxu0 %v294
        %v835 = vpop.f32.mrb[0].mxu0
        %v836 = vadd.f32 %v383, %v835
        %v837 = vpop.f32.mrb[0].mxu0
        %v838 = vadd.f32 %v387, %v837
        %839 = vmatprep.mubr.f32.mxu0 0.0
        %840 = vmatmul.mubr.f32.gmra.mrb[0].mxu0 %v295
        %v841 = vpop.f32.mrb[0].mxu0
        %v842 = vadd.f32 %v383, %v841
        %v843 = vpop.f32.mrb[0].mxu0
        %v844 = vadd.f32 %v387, %v843
        %845 = vmatprep.mubr.f32.mxu0 0.0
        %846 = vmatmul.mubr.f32.gmra.mrb[0].mxu0 %v296
        %v847 = vpop.f32.mrb[0].mxu0
        %v848 = vadd.f32 %v383, %v847
        %v849 = vpop.f32.mrb[0].mxu0
        %v850 = vadd.f32 %v387, %v849
        %851 = vmatprep.mubr.f32.mxu0 0.0
        %852 = vmatmul.mubr.f32.gmra.mrb[0].mxu0 %v297
        %v853 = vpop.f32.mrb[0].mxu0
        %v854 = vadd.f32 %v383, %v853
        %v855 = vpop.f32.mrb[0].mxu0
        %v856 = vadd.f32 %v387, %v855
        %857 = vmatprep.mubr.f32.mxu0 0.0
        %858 = vmatmul.mubr.f32.gmra.mrb[0].mxu0 %v298
        %v859 = vpop.f32.mrb[0].mxu0
        %v860 = vadd.f32 %v383, %v859
        %v861 = vpop.f32.mrb[0].mxu0
        %v862 = vadd.f32 %v387, %v861
        %863 = vmatprep.mubr.f32.mxu0 0.0
        %864 = vmatmul.mubr.f32.gmra.mrb[0].mxu0 %v299
        %v865 = vpop.f32.mrb[0].mxu0
        %v866 = vadd.f32 %v383, %v865
        %v867 = vpop.f32.mrb[0].mxu0
        %v868 = vadd.f32 %v387, %v867
        %869 = vmatprep.mubr.f32.mxu0 0.0
        %870 = vmatmul.mubr.f32.gmra.mrb[0].mxu0 %v300
        %v871 = vpop.f32.mrb[0].mxu0
        %v872 = vadd.f32 %v383, %v871
        %v873 = vpop.f32.mrb[0].mxu0
        %v874 = vadd.f32 %v387, %v873
        %875 = vmatprep.mubr.f32.mxu0 0.0
        %876 = vmatmul.mubr.f32.gmra.mrb[0].mxu0 %v301
        %v877 = vpop.f32.mrb[0].mxu0
        %v878 = vadd.f32 %v383, %v877
        %v879 = vpop.f32.mrb[0].mxu0
        %v880 = vadd.f32 %v387, %v879
        %881 = vmatprep.mubr.f32.mxu0 0.0
        %882 = vmatmul.mubr.f32.gmra.mrb[0].mxu0 %v302
        %v883 = vpop.f32.mrb[0].mxu0
        %v884 = vadd.f32 %v383, %v883
        %v885 = vpop.f32.mrb[0].mxu0
        %v886 = vadd.f32 %v387, %v885
        %887 = vmatprep.mubr.f32.mxu0 0.0
        %888 = vmatmul.mubr.f32.gmra.mrb[0].mxu0 %v303
        %v889 = vpop.f32.mrb[0].mxu0
        %v890 = vadd.f32 %v383, %v889
        %v891 = vpop.f32.mrb[0].mxu0
        %v892 = vadd.f32 %v387, %v891
        %893 = vmatprep.mubr.f32.mxu0 0.0
        %894 = vmatmul.mubr.f32.gmra.mrb[0].mxu0 %v304
        %v895 = vpop.f32.mrb[0].mxu0
        %v896 = vadd.f32 %v383, %v895
        %v897 = vpop.f32.mrb[0].mxu0
        %v898 = vadd.f32 %v387, %v897
        %899 = vmatprep.mubr.f32.mxu0 0.0
        %900 = vmatmul.mubr.f32.gmra.mrb[0].mxu0 %v305
        %v901 = vpop.f32.mrb[0].mxu0
        %v902 = vadd.f32 %v383, %v901
        %v903 = vpop.f32.mrb[0].mxu0
        %v904 = vadd.f32 %v387, %v903
        %905 = vdwg.mxu0
        %v906 = vmul.f32 %v459, 0.5
        %v907 = vmul.f32 %v461, 0.5
        %v908 = vmul.f32 %v716, 0.5
        %v909 = vmul.f32 %v718, 0.5
        %v910 = vmul.f32 %v465, 0.5
        %v911 = vmul.f32 %v467, 0.5
        %v912 = vmul.f32 %v722, 0.5
        %v913 = vmul.f32 %v724, 0.5
        %v914 = vmul.f32 %v471, 0.5
        %v915 = vmul.f32 %v473, 0.5
        %v916 = vmul.f32 %v728, 0.5
        %v917 = vmul.f32 %v730, 0.5
        %v918 = vmul.f32 %v477, 0.5
        %v919 = vmul.f32 %v479, 0.5
        %v920 = vmul.f32 %v734, 0.5
        %v921 = vmul.f32 %v736, 0.5
        %v922 = vmul.f32 %v483, 0.5
        %v923 = vmul.f32 %v485, 0.5
        %v924 = vmul.f32 %v740, 0.5
        %v925 = vmul.f32 %v742, 0.5
        %v926 = vmul.f32 %v489, 0.5
        %v927 = vmul.f32 %v491, 0.5
        %v928 = vmul.f32 %v746, 0.5
        %v929 = vmul.f32 %v748, 0.5
        %v930 = vmul.f32 %v495, 0.5
        %v931 = vmul.f32 %v497, 0.5
        %v932 = vmul.f32 %v752, 0.5
        %v933 = vmul.f32 %v754, 0.5
        %v934 = vmul.f32 %v501, 0.5
        %v935 = vmul.f32 %v503, 0.5
        %v936 = vmul.f32 %v758, 0.5
        %v937 = vmul.f32 %v760, 0.5
        %v938 = vmul.f32 %v507, 0.5
        %v939 = vmul.f32 %v509, 0.5
        %v940 = vmul.f32 %v764, 0.5
        %v941 = vmul.f32 %v766, 0.5
        %v942 = vmul.f32 %v513, 0.5
        %v943 = vmul.f32 %v515, 0.5
        %v944 = vmul.f32 %v770, 0.5
        %v945 = vmul.f32 %v772, 0.5
        %v946 = vmul.f32 %v519, 0.5
        %v947 = vmul.f32 %v521, 0.5
        %v948 = vmul.f32 %v776, 0.5
        %v949 = vmul.f32 %v778, 0.5
        %v950 = vmul.f32 %v525, 0.5
        %v951 = vmul.f32 %v527, 0.5
        %v952 = vmul.f32 %v782, 0.5
        %v953 = vmul.f32 %v784, 0.5
        %v954 = vmul.f32 %v531, 0.5
        %v955 = vmul.f32 %v533, 0.5
        %v956 = vmul.f32 %v788, 0.5
        %v957 = vmul.f32 %v790, 0.5
        %v958 = vmul.f32 %v537, 0.5
        %v959 = vmul.f32 %v539, 0.5
        %v960 = vmul.f32 %v794, 0.5
        %v961 = vmul.f32 %v796, 0.5
        %v962 = vmul.f32 %v543, 0.5
        %v963 = vmul.f32 %v545, 0.5
        %v964 = vmul.f32 %v800, 0.5
        %v965 = vmul.f32 %v802, 0.5
        %v966 = vmul.f32 %v549, 0.5
        %v967 = vmul.f32 %v551, 0.5
        %v968 = vmul.f32 %v806, 0.5
        %v969 = vmul.f32 %v808, 0.5
        %v970 = vmul.f32 %v555, 0.5
        %v971 = vmul.f32 %v557, 0.5
        %v972 = vmul.f32 %v812, 0.5
        %v973 = vmul.f32 %v814, 0.5
        %v974 = vmul.f32 %v561, 0.5
        %v975 = vmul.f32 %v563, 0.5
        %v976 = vmul.f32 %v818, 0.5
        %v977 = vmul.f32 %v820, 0.5
        %v978 = vmul.f32 %v567, 0.5
        %v979 = vmul.f32 %v569, 0.5
        %v980 = vmul.f32 %v824, 0.5
        %v981 = vmul.f32 %v826, 0.5
        %v982 = vmul.f32 %v573, 0.5
        %v983 = vmul.f32 %v575, 0.5
        %v984 = vmul.f32 %v830, 0.5
        %v985 = vmul.f32 %v832, 0.5
        %v986 = vmul.f32 %v579, 0.5
        %v987 = vmul.f32 %v581, 0.5
        %v988 = vmul.f32 %v836, 0.5
        %v989 = vmul.f32 %v838, 0.5
        %v990 = vmul.f32 %v585, 0.5
        %v991 = vmul.f32 %v587, 0.5
        %v992 = vmul.f32 %v842, 0.5
        %v993 = vmul.f32 %v844, 0.5
        %v994 = vmul.f32 %v591, 0.5
        %v995 = vmul.f32 %v593, 0.5
        %v996 = vmul.f32 %v848, 0.5
        %v997 = vmul.f32 %v850, 0.5
        %v998 = vmul.f32 %v597, 0.5
        %v999 = vmul.f32 %v599, 0.5
        %v1000 = vmul.f32 %v854, 0.5
        %v1001 = vmul.f32 %v856, 0.5
        %v1002 = vmul.f32 %v603, 0.5
        %v1003 = vmul.f32 %v605, 0.5
        %v1004 = vmul.f32 %v860, 0.5
        %v1005 = vmul.f32 %v862, 0.5
        %v1006 = vmul.f32 %v609, 0.5
        %v1007 = vmul.f32 %v611, 0.5
        %v1008 = vmul.f32 %v866, 0.5
        %v1009 = vmul.f32 %v868, 0.5
        %v1010 = vmul.f32 %v615, 0.5
        %v1011 = vmul.f32 %v617, 0.5
        %v1012 = vmul.f32 %v872, 0.5
        %v1013 = vmul.f32 %v874, 0.5
        %v1014 = vmul.f32 %v621, 0.5
        %v1015 = vmul.f32 %v623, 0.5
        %v1016 = vmul.f32 %v878, 0.5
        %v1017 = vmul.f32 %v880, 0.5
        %v1018 = vmul.f32 %v627, 0.5
        %v1019 = vmul.f32 %v629, 0.5
        %v1020 = vmul.f32 %v884, 0.5
        %v1021 = vmul.f32 %v886, 0.5
        %v1022 = vmul.f32 %v633, 0.5
        %v1023 = vmul.f32 %v635, 0.5
        %v1024 = vmul.f32 %v890, 0.5
        %v1025 = vmul.f32 %v892, 0.5
        %v1026 = vmul.f32 %v639, 0.5
        %v1027 = vmul.f32 %v641, 0.5
        %v1028 = vmul.f32 %v896, 0.5
        %v1029 = vmul.f32 %v898, 0.5
        %v1030 = vmul.f32 %v645, 0.5
        %v1031 = vmul.f32 %v647, 0.5
        %v1032 = vmul.f32 %v902, 0.5
        %v1033 = vmul.f32 %v904, 0.5
        %v1034 = vmul.f32 %v459, %v459
        %v1035 = vmul.f32 %v461, %v461
        %v1036 = vmul.f32 %v716, %v716
        %v1037 = vmul.f32 %v718, %v718
        %v1038 = vmul.f32 %v465, %v465
        %v1039 = vmul.f32 %v467, %v467
        %v1040 = vmul.f32 %v722, %v722
        %v1041 = vmul.f32 %v724, %v724
        %v1042 = vmul.f32 %v471, %v471
        %v1043 = vmul.f32 %v473, %v473
        %v1044 = vmul.f32 %v728, %v728
        %v1045 = vmul.f32 %v730, %v730
        %v1046 = vmul.f32 %v477, %v477
        %v1047 = vmul.f32 %v479, %v479
        %v1048 = vmul.f32 %v734, %v734
        %v1049 = vmul.f32 %v736, %v736
        %v1050 = vmul.f32 %v483, %v483
        %v1051 = vmul.f32 %v485, %v485
        %v1052 = vmul.f32 %v740, %v740
        %v1053 = vmul.f32 %v742, %v742
        %v1054 = vmul.f32 %v489, %v489
        %v1055 = vmul.f32 %v491, %v491
        %v1056 = vmul.f32 %v746, %v746
        %v1057 = vmul.f32 %v748, %v748
        %v1058 = vmul.f32 %v495, %v495
        %v1059 = vmul.f32 %v497, %v497
        %v1060 = vmul.f32 %v752, %v752
        %v1061 = vmul.f32 %v754, %v754
        %v1062 = vmul.f32 %v501, %v501
        %v1063 = vmul.f32 %v503, %v503
        %v1064 = vmul.f32 %v758, %v758
        %v1065 = vmul.f32 %v760, %v760
        %v1066 = vmul.f32 %v507, %v507
        %v1067 = vmul.f32 %v509, %v509
        %v1068 = vmul.f32 %v764, %v764
        %v1069 = vmul.f32 %v766, %v766
        %v1070 = vmul.f32 %v513, %v513
        %v1071 = vmul.f32 %v515, %v515
        %v1072 = vmul.f32 %v770, %v770
        %v1073 = vmul.f32 %v772, %v772
        %v1074 = vmul.f32 %v519, %v519
        %v1075 = vmul.f32 %v521, %v521
        %v1076 = vmul.f32 %v776, %v776
        %v1077 = vmul.f32 %v778, %v778
        %v1078 = vmul.f32 %v525, %v525
        %v1079 = vmul.f32 %v527, %v527
        %v1080 = vmul.f32 %v782, %v782
        %v1081 = vmul.f32 %v784, %v784
        %v1082 = vmul.f32 %v531, %v531
        %v1083 = vmul.f32 %v533, %v533
        %v1084 = vmul.f32 %v788, %v788
        %v1085 = vmul.f32 %v790, %v790
        %v1086 = vmul.f32 %v537, %v537
        %v1087 = vmul.f32 %v539, %v539
        %v1088 = vmul.f32 %v794, %v794
        %v1089 = vmul.f32 %v796, %v796
        %v1090 = vmul.f32 %v543, %v543
        %v1091 = vmul.f32 %v545, %v545
        %v1092 = vmul.f32 %v800, %v800
        %v1093 = vmul.f32 %v802, %v802
        %v1094 = vmul.f32 %v549, %v549
        %v1095 = vmul.f32 %v551, %v551
        %v1096 = vmul.f32 %v806, %v806
        %v1097 = vmul.f32 %v808, %v808
        %v1098 = vmul.f32 %v555, %v555
        %v1099 = vmul.f32 %v557, %v557
        %v1100 = vmul.f32 %v812, %v812
        %v1101 = vmul.f32 %v814, %v814
        %v1102 = vmul.f32 %v561, %v561
        %v1103 = vmul.f32 %v563, %v563
        %v1104 = vmul.f32 %v818, %v818
        %v1105 = vmul.f32 %v820, %v820
        %v1106 = vmul.f32 %v567, %v567
        %v1107 = vmul.f32 %v569, %v569
        %v1108 = vmul.f32 %v824, %v824
        %v1109 = vmul.f32 %v826, %v826
        %v1110 = vmul.f32 %v573, %v573
        %v1111 = vmul.f32 %v575, %v575
        %v1112 = vmul.f32 %v830, %v830
        %v1113 = vmul.f32 %v832, %v832
        %v1114 = vmul.f32 %v579, %v579
        %v1115 = vmul.f32 %v581, %v581
        %v1116 = vmul.f32 %v836, %v836
        %v1117 = vmul.f32 %v838, %v838
        %v1118 = vmul.f32 %v585, %v585
        %v1119 = vmul.f32 %v587, %v587
        %v1120 = vmul.f32 %v842, %v842
        %v1121 = vmul.f32 %v844, %v844
        %v1122 = vmul.f32 %v591, %v591
        %v1123 = vmul.f32 %v593, %v593
        %v1124 = vmul.f32 %v848, %v848
        %v1125 = vmul.f32 %v850, %v850
        %v1126 = vmul.f32 %v597, %v597
        %v1127 = vmul.f32 %v599, %v599
        %v1128 = vmul.f32 %v854, %v854
        %v1129 = vmul.f32 %v856, %v856
        %v1130 = vmul.f32 %v603, %v603
        %v1131 = vmul.f32 %v605, %v605
        %v1132 = vmul.f32 %v860, %v860
        %v1133 = vmul.f32 %v862, %v862
        %v1134 = vmul.f32 %v609, %v609
        %v1135 = vmul.f32 %v611, %v611
        %v1136 = vmul.f32 %v866, %v866
        %v1137 = vmul.f32 %v868, %v868
        %v1138 = vmul.f32 %v615, %v615
        %v1139 = vmul.f32 %v617, %v617
        %v1140 = vmul.f32 %v872, %v872
        %v1141 = vmul.f32 %v874, %v874
        %v1142 = vmul.f32 %v621, %v621
        %v1143 = vmul.f32 %v623, %v623
        %v1144 = vmul.f32 %v878, %v878
        %v1145 = vmul.f32 %v880, %v880
        %v1146 = vmul.f32 %v627, %v627
        %v1147 = vmul.f32 %v629, %v629
        %v1148 = vmul.f32 %v884, %v884
        %v1149 = vmul.f32 %v886, %v886
        %v1150 = vmul.f32 %v633, %v633
        %v1151 = vmul.f32 %v635, %v635
        %v1152 = vmul.f32 %v890, %v890
        %v1153 = vmul.f32 %v892, %v892
        %v1154 = vmul.f32 %v639, %v639
        %v1155 = vmul.f32 %v641, %v641
        %v1156 = vmul.f32 %v896, %v896
        %v1157 = vmul.f32 %v898, %v898
        %v1158 = vmul.f32 %v645, %v645
        %v1159 = vmul.f32 %v647, %v647
        %v1160 = vmul.f32 %v902, %v902
        %v1161 = vmul.f32 %v904, %v904
        %v1162 = vmul.f32 %v1034, %v459
        %v1163 = vmul.f32 %v1035, %v461
        %v1164 = vmul.f32 %v1036, %v716
        %v1165 = vmul.f32 %v1037, %v718
        %v1166 = vmul.f32 %v1038, %v465
        %v1167 = vmul.f32 %v1039, %v467
        %v1168 = vmul.f32 %v1040, %v722
        %v1169 = vmul.f32 %v1041, %v724
        %v1170 = vmul.f32 %v1042, %v471
        %v1171 = vmul.f32 %v1043, %v473
        %v1172 = vmul.f32 %v1044, %v728
        %v1173 = vmul.f32 %v1045, %v730
        %v1174 = vmul.f32 %v1046, %v477
        %v1175 = vmul.f32 %v1047, %v479
        %v1176 = vmul.f32 %v1048, %v734
        %v1177 = vmul.f32 %v1049, %v736
        %v1178 = vmul.f32 %v1050, %v483
        %v1179 = vmul.f32 %v1051, %v485
        %v1180 = vmul.f32 %v1052, %v740
        %v1181 = vmul.f32 %v1053, %v742
        %v1182 = vmul.f32 %v1054, %v489
        %v1183 = vmul.f32 %v1055, %v491
        %v1184 = vmul.f32 %v1056, %v746
        %v1185 = vmul.f32 %v1057, %v748
        %v1186 = vmul.f32 %v1058, %v495
        %v1187 = vmul.f32 %v1059, %v497
        %v1188 = vmul.f32 %v1060, %v752
        %v1189 = vmul.f32 %v1061, %v754
        %v1190 = vmul.f32 %v1062, %v501
        %v1191 = vmul.f32 %v1063, %v503
        %v1192 = vmul.f32 %v1064, %v758
        %v1193 = vmul.f32 %v1065, %v760
        %v1194 = vmul.f32 %v1066, %v507
        %v1195 = vmul.f32 %v1067, %v509
        %v1196 = vmul.f32 %v1068, %v764
        %v1197 = vmul.f32 %v1069, %v766
        %v1198 = vmul.f32 %v1070, %v513
        %v1199 = vmul.f32 %v1071, %v515
        %v1200 = vmul.f32 %v1072, %v770
        %v1201 = vmul.f32 %v1073, %v772
        %v1202 = vmul.f32 %v1074, %v519
        %v1203 = vmul.f32 %v1075, %v521
        %v1204 = vmul.f32 %v1076, %v776
        %v1205 = vmul.f32 %v1077, %v778
        %v1206 = vmul.f32 %v1078, %v525
        %v1207 = vmul.f32 %v1079, %v527
        %v1208 = vmul.f32 %v1080, %v782
        %v1209 = vmul.f32 %v1081, %v784
        %v1210 = vmul.f32 %v1082, %v531
        %v1211 = vmul.f32 %v1083, %v533
        %v1212 = vmul.f32 %v1084, %v788
        %v1213 = vmul.f32 %v1085, %v790
        %v1214 = vmul.f32 %v1086, %v537
        %v1215 = vmul.f32 %v1087, %v539
        %v1216 = vmul.f32 %v1088, %v794
        %v1217 = vmul.f32 %v1089, %v796
        %v1218 = vmul.f32 %v1090, %v543
        %v1219 = vmul.f32 %v1091, %v545
        %v1220 = vmul.f32 %v1092, %v800
        %v1221 = vmul.f32 %v1093, %v802
        %v1222 = vmul.f32 %v1094, %v549
        %v1223 = vmul.f32 %v1095, %v551
        %v1224 = vmul.f32 %v1096, %v806
        %v1225 = vmul.f32 %v1097, %v808
        %v1226 = vmul.f32 %v1098, %v555
        %v1227 = vmul.f32 %v1099, %v557
        %v1228 = vmul.f32 %v1100, %v812
        %v1229 = vmul.f32 %v1101, %v814
        %v1230 = vmul.f32 %v1102, %v561
        %v1231 = vmul.f32 %v1103, %v563
        %v1232 = vmul.f32 %v1104, %v818
        %v1233 = vmul.f32 %v1105, %v820
        %v1234 = vmul.f32 %v1106, %v567
        %v1235 = vmul.f32 %v1107, %v569
        %v1236 = vmul.f32 %v1108, %v824
        %v1237 = vmul.f32 %v1109, %v826
        %v1238 = vmul.f32 %v1110, %v573
        %v1239 = vmul.f32 %v1111, %v575
        %v1240 = vmul.f32 %v1112, %v830
        %v1241 = vmul.f32 %v1113, %v832
        %v1242 = vmul.f32 %v1114, %v579
        %v1243 = vmul.f32 %v1115, %v581
        %v1244 = vmul.f32 %v1116, %v836
        %v1245 = vmul.f32 %v1117, %v838
        %v1246 = vmul.f32 %v1118, %v585
        %v1247 = vmul.f32 %v1119, %v587
        %v1248 = vmul.f32 %v1120, %v842
        %v1249 = vmul.f32 %v1121, %v844
        %v1250 = vmul.f32 %v1122, %v591
        %v1251 = vmul.f32 %v1123, %v593
        %v1252 = vmul.f32 %v1124, %v848
        %v1253 = vmul.f32 %v1125, %v850
        %v1254 = vmul.f32 %v1126, %v597
        %v1255 = vmul.f32 %v1127, %v599
        %v1256 = vmul.f32 %v1128, %v854
        %v1257 = vmul.f32 %v1129, %v856
        %v1258 = vmul.f32 %v1130, %v603
        %v1259 = vmul.f32 %v1131, %v605
        %v1260 = vmul.f32 %v1132, %v860
        %v1261 = vmul.f32 %v1133, %v862
        %v1262 = vmul.f32 %v1134, %v609
        %v1263 = vmul.f32 %v1135, %v611
        %v1264 = vmul.f32 %v1136, %v866
        %v1265 = vmul.f32 %v1137, %v868
        %v1266 = vmul.f32 %v1138, %v615
        %v1267 = vmul.f32 %v1139, %v617
        %v1268 = vmul.f32 %v1140, %v872
        %v1269 = vmul.f32 %v1141, %v874
        %v1270 = vmul.f32 %v1142, %v621
        %v1271 = vmul.f32 %v1143, %v623
        %v1272 = vmul.f32 %v1144, %v878
        %v1273 = vmul.f32 %v1145, %v880
        %v1274 = vmul.f32 %v1146, %v627
        %v1275 = vmul.f32 %v1147, %v629
        %v1276 = vmul.f32 %v1148, %v884
        %v1277 = vmul.f32 %v1149, %v886
        %v1278 = vmul.f32 %v1150, %v633
        %v1279 = vmul.f32 %v1151, %v635
        %v1280 = vmul.f32 %v1152, %v890
        %v1281 = vmul.f32 %v1153, %v892
        %v1282 = vmul.f32 %v1154, %v639
        %v1283 = vmul.f32 %v1155, %v641
        %v1284 = vmul.f32 %v1156, %v896
        %v1285 = vmul.f32 %v1157, %v898
        %v1286 = vmul.f32 %v1158, %v645
        %v1287 = vmul.f32 %v1159, %v647
        %v1288 = vmul.f32 %v1160, %v902
        %v1289 = vmul.f32 %v1161, %v904
        %v1290 = vmul.f32 %v1162, 0.044715
        %v1291 = vmul.f32 %v1163, 0.044715
        %v1292 = vmul.f32 %v1164, 0.044715
        %v1293 = vmul.f32 %v1165, 0.044715
        %v1294 = vmul.f32 %v1166, 0.044715
        %v1295 = vmul.f32 %v1167, 0.044715
        %v1296 = vmul.f32 %v1168, 0.044715
        %v1297 = vmul.f32 %v1169, 0.044715
        %v1298 = vmul.f32 %v1170, 0.044715
        %v1299 = vmul.f32 %v1171, 0.044715
        %v1300 = vmul.f32 %v1172, 0.044715
        %v1301 = vmul.f32 %v1173, 0.044715
        %v1302 = vmul.f32 %v1174, 0.044715
        %v1303 = vmul.f32 %v1175, 0.044715
        %v1304 = vmul.f32 %v1176, 0.044715
        %v1305 = vmul.f32 %v1177, 0.044715
        %v1306 = vmul.f32 %v1178, 0.044715
        %v1307 = vmul.f32 %v1179, 0.044715
        %v1308 = vmul.f32 %v1180, 0.044715
        %v1309 = vmul.f32 %v1181, 0.044715
        %v1310 = vmul.f32 %v1182, 0.044715
        %v1311 = vmul.f32 %v1183, 0.044715
        %v1312 = vmul.f32 %v1184, 0.044715
        %v1313 = vmul.f32 %v1185, 0.044715
        %v1314 = vmul.f32 %v1186, 0.044715
        %v1315 = vmul.f32 %v1187, 0.044715
        %v1316 = vmul.f32 %v1188, 0.044715
        %v1317 = vmul.f32 %v1189, 0.044715
        %v1318 = vmul.f32 %v1190, 0.044715
        %v1319 = vmul.f32 %v1191, 0.044715
        %v1320 = vmul.f32 %v1192, 0.044715
        %v1321 = vmul.f32 %v1193, 0.044715
        %v1322 = vmul.f32 %v1194, 0.044715
        %v1323 = vmul.f32 %v1195, 0.044715
        %v1324 = vmul.f32 %v1196, 0.044715
        %v1325 = vmul.f32 %v1197, 0.044715
        %v1326 = vmul.f32 %v1198, 0.044715
        %v1327 = vmul.f32 %v1199, 0.044715
        %v1328 = vmul.f32 %v1200, 0.044715
        %v1329 = vmul.f32 %v1201, 0.044715
        %v1330 = vmul.f32 %v1202, 0.044715
        %v1331 = vmul.f32 %v1203, 0.044715
        %v1332 = vmul.f32 %v1204, 0.044715
        %v1333 = vmul.f32 %v1205, 0.044715
        %v1334 = vmul.f32 %v1206, 0.044715
        %v1335 = vmul.f32 %v1207, 0.044715
        %v1336 = vmul.f32 %v1208, 0.044715
        %v1337 = vmul.f32 %v1209, 0.044715
        %v1338 = vmul.f32 %v1210, 0.044715
        %v1339 = vmul.f32 %v1211, 0.044715
        %v1340 = vmul.f32 %v1212, 0.044715
        %v1341 = vmul.f32 %v1213, 0.044715
        %v1342 = vmul.f32 %v1214, 0.044715
        %v1343 = vmul.f32 %v1215, 0.044715
        %v1344 = vmul.f32 %v1216, 0.044715
        %v1345 = vmul.f32 %v1217, 0.044715
        %v1346 = vmul.f32 %v1218, 0.044715
        %v1347 = vmul.f32 %v1219, 0.044715
        %v1348 = vmul.f32 %v1220, 0.044715
        %v1349 = vmul.f32 %v1221, 0.044715
        %v1350 = vmul.f32 %v1222, 0.044715
        %v1351 = vmul.f32 %v1223, 0.044715
        %v1352 = vmul.f32 %v1224, 0.044715
        %v1353 = vmul.f32 %v1225, 0.044715
        %v1354 = vmul.f32 %v1226, 0.044715
        %v1355 = vmul.f32 %v1227, 0.044715
        %v1356 = vmul.f32 %v1228, 0.044715
        %v1357 = vmul.f32 %v1229, 0.044715
        %v1358 = vmul.f32 %v1230, 0.044715
        %v1359 = vmul.f32 %v1231, 0.044715
        %v1360 = vmul.f32 %v1232, 0.044715
        %v1361 = vmul.f32 %v1233, 0.044715
        %v1362 = vmul.f32 %v1234, 0.044715
        %v1363 = vmul.f32 %v1235, 0.044715
        %v1364 = vmul.f32 %v1236, 0.044715
        %v1365 = vmul.f32 %v1237, 0.044715
        %v1366 = vmul.f32 %v1238, 0.044715
        %v1367 = vmul.f32 %v1239, 0.044715
        %v1368 = vmul.f32 %v1240, 0.044715
        %v1369 = vmul.f32 %v1241, 0.044715
        %v1370 = vmul.f32 %v1242, 0.044715
        %v1371 = vmul.f32 %v1243, 0.044715
        %v1372 = vmul.f32 %v1244, 0.044715
        %v1373 = vmul.f32 %v1245, 0.044715
        %v1374 = vmul.f32 %v1246, 0.044715
        %v1375 = vmul.f32 %v1247, 0.044715
        %v1376 = vmul.f32 %v1248, 0.044715
        %v1377 = vmul.f32 %v1249, 0.044715
        %v1378 = vmul.f32 %v1250, 0.044715
        %v1379 = vmul.f32 %v1251, 0.044715
        %v1380 = vmul.f32 %v1252, 0.044715
        %v1381 = vmul.f32 %v1253, 0.044715
        %v1382 = vmul.f32 %v1254, 0.044715
        %v1383 = vmul.f32 %v1255, 0.044715
        %v1384 = vmul.f32 %v1256, 0.044715
        %v1385 = vmul.f32 %v1257, 0.044715
        %v1386 = vmul.f32 %v1258, 0.044715
        %v1387 = vmul.f32 %v1259, 0.044715
        %v1388 = vmul.f32 %v1260, 0.044715
        %v1389 = vmul.f32 %v1261, 0.044715
        %v1390 = vmul.f32 %v1262, 0.044715
        %v1391 = vmul.f32 %v1263, 0.044715
        %v1392 = vmul.f32 %v1264, 0.044715
        %v1393 = vmul.f32 %v1265, 0.044715
        %v1394 = vmul.f32 %v1266, 0.044715
        %v1395 = vmul.f32 %v1267, 0.044715
        %v1396 = vmul.f32 %v1268, 0.044715
        %v1397 = vmul.f32 %v1269, 0.044715
        %v1398 = vmul.f32 %v1270, 0.044715
        %v1399 = vmul.f32 %v1271, 0.044715
        %v1400 = vmul.f32 %v1272, 0.044715
        %v1401 = vmul.f32 %v1273, 0.044715
        %v1402 = vmul.f32 %v1274, 0.044715
        %v1403 = vmul.f32 %v1275, 0.044715
        %v1404 = vmul.f32 %v1276, 0.044715
        %v1405 = vmul.f32 %v1277, 0.044715
        %v1406 = vmul.f32 %v1278, 0.044715
        %v1407 = vmul.f32 %v1279, 0.044715
        %v1408 = vmul.f32 %v1280, 0.044715
        %v1409 = vmul.f32 %v1281, 0.044715
        %v1410 = vmul.f32 %v1282, 0.044715
        %v1411 = vmul.f32 %v1283, 0.044715
        %v1412 = vmul.f32 %v1284, 0.044715
        %v1413 = vmul.f32 %v1285, 0.044715
        %v1414 = vmul.f32 %v1286, 0.044715
        %v1415 = vmul.f32 %v1287, 0.044715
        %v1416 = vmul.f32 %v1288, 0.044715
        %v1417 = vmul.f32 %v1289, 0.044715
        %v1418 = vadd.f32 %v459, %v1290
        %v1419 = vadd.f32 %v461, %v1291
        %v1420 = vadd.f32 %v716, %v1292
        %v1421 = vadd.f32 %v718, %v1293
        %v1422 = vadd.f32 %v465, %v1294
        %v1423 = vadd.f32 %v467, %v1295
        %v1424 = vadd.f32 %v722, %v1296
        %v1425 = vadd.f32 %v724, %v1297
        %v1426 = vadd.f32 %v471, %v1298
        %v1427 = vadd.f32 %v473, %v1299
        %v1428 = vadd.f32 %v728, %v1300
        %v1429 = vadd.f32 %v730, %v1301
        %v1430 = vadd.f32 %v477, %v1302
        %v1431 = vadd.f32 %v479, %v1303
        %v1432 = vadd.f32 %v734, %v1304
        %v1433 = vadd.f32 %v736, %v1305
        %v1434 = vadd.f32 %v483, %v1306
        %v1435 = vadd.f32 %v485, %v1307
        %v1436 = vadd.f32 %v740, %v1308
        %v1437 = vadd.f32 %v742, %v1309
        %v1438 = vadd.f32 %v489, %v1310
        %v1439 = vadd.f32 %v491, %v1311
        %v1440 = vadd.f32 %v746, %v1312
        %v1441 = vadd.f32 %v748, %v1313
        %v1442 = vadd.f32 %v495, %v1314
        %v1443 = vadd.f32 %v497, %v1315
        %v1444 = vadd.f32 %v752, %v1316
        %v1445 = vadd.f32 %v754, %v1317
        %v1446 = vadd.f32 %v501, %v1318
        %v1447 = vadd.f32 %v503, %v1319
        %v1448 = vadd.f32 %v758, %v1320
        %v1449 = vadd.f32 %v760, %v1321
        %v1450 = vadd.f32 %v507, %v1322
        %v1451 = vadd.f32 %v509, %v1323
        %v1452 = vadd.f32 %v764, %v1324
        %v1453 = vadd.f32 %v766, %v1325
        %v1454 = vadd.f32 %v513, %v1326
        %v1455 = vadd.f32 %v515, %v1327
        %v1456 = vadd.f32 %v770, %v1328
        %v1457 = vadd.f32 %v772, %v1329
        %v1458 = vadd.f32 %v519, %v1330
        %v1459 = vadd.f32 %v521, %v1331
        %v1460 = vadd.f32 %v776, %v1332
        %v1461 = vadd.f32 %v778, %v1333
        %v1462 = vadd.f32 %v525, %v1334
        %v1463 = vadd.f32 %v527, %v1335
        %v1464 = vadd.f32 %v782, %v1336
        %v1465 = vadd.f32 %v784, %v1337
        %v1466 = vadd.f32 %v531, %v1338
        %v1467 = vadd.f32 %v533, %v1339
        %v1468 = vadd.f32 %v788, %v1340
        %v1469 = vadd.f32 %v790, %v1341
        %v1470 = vadd.f32 %v537, %v1342
        %v1471 = vadd.f32 %v539, %v1343
        %v1472 = vadd.f32 %v794, %v1344
        %v1473 = vadd.f32 %v796, %v1345
        %v1474 = vadd.f32 %v543, %v1346
        %v1475 = vadd.f32 %v545, %v1347
        %v1476 = vadd.f32 %v800, %v1348
        %v1477 = vadd.f32 %v802, %v1349
        %v1478 = vadd.f32 %v549, %v1350
        %v1479 = vadd.f32 %v551, %v1351
        %v1480 = vadd.f32 %v806, %v1352
        %v1481 = vadd.f32 %v808, %v1353
        %v1482 = vadd.f32 %v555, %v1354
        %v1483 = vadd.f32 %v557, %v1355
        %v1484 = vadd.f32 %v812, %v1356
        %v1485 = vadd.f32 %v814, %v1357
        %v1486 = vadd.f32 %v561, %v1358
        %v1487 = vadd.f32 %v563, %v1359
        %v1488 = vadd.f32 %v818, %v1360
        %v1489 = vadd.f32 %v820, %v1361
        %v1490 = vadd.f32 %v567, %v1362
        %v1491 = vadd.f32 %v569, %v1363
        %v1492 = vadd.f32 %v824, %v1364
        %v1493 = vadd.f32 %v826, %v1365
        %v1494 = vadd.f32 %v573, %v1366
        %v1495 = vadd.f32 %v575, %v1367
        %v1496 = vadd.f32 %v830, %v1368
        %v1497 = vadd.f32 %v832, %v1369
        %v1498 = vadd.f32 %v579, %v1370
        %v1499 = vadd.f32 %v581, %v1371
        %v1500 = vadd.f32 %v836, %v1372
        %v1501 = vadd.f32 %v838, %v1373
        %v1502 = vadd.f32 %v585, %v1374
        %v1503 = vadd.f32 %v587, %v1375
        %v1504 = vadd.f32 %v842, %v1376
        %v1505 = vadd.f32 %v844, %v1377
        %v1506 = vadd.f32 %v591, %v1378
        %v1507 = vadd.f32 %v593, %v1379
        %v1508 = vadd.f32 %v848, %v1380
        %v1509 = vadd.f32 %v850, %v1381
        %v1510 = vadd.f32 %v597, %v1382
        %v1511 = vadd.f32 %v599, %v1383
        %v1512 = vadd.f32 %v854, %v1384
        %v1513 = vadd.f32 %v856, %v1385
        %v1514 = vadd.f32 %v603, %v1386
        %v1515 = vadd.f32 %v605, %v1387
        %v1516 = vadd.f32 %v860, %v1388
        %v1517 = vadd.f32 %v862, %v1389
        %v1518 = vadd.f32 %v609, %v1390
        %v1519 = vadd.f32 %v611, %v1391
        %v1520 = vadd.f32 %v866, %v1392
        %v1521 = vadd.f32 %v868, %v1393
        %v1522 = vadd.f32 %v615, %v1394
        %v1523 = vadd.f32 %v617, %v1395
        %v1524 = vadd.f32 %v872, %v1396
        %v1525 = vadd.f32 %v874, %v1397
        %v1526 = vadd.f32 %v621, %v1398
        %v1527 = vadd.f32 %v623, %v1399
        %v1528 = vadd.f32 %v878, %v1400
        %v1529 = vadd.f32 %v880, %v1401
        %v1530 = vadd.f32 %v627, %v1402
        %v1531 = vadd.f32 %v629, %v1403
        %v1532 = vadd.f32 %v884, %v1404
        %v1533 = vadd.f32 %v886, %v1405
        %v1534 = vadd.f32 %v633, %v1406
        %v1535 = vadd.f32 %v635, %v1407
        %v1536 = vadd.f32 %v890, %v1408
        %v1537 = vadd.f32 %v892, %v1409
        %v1538 = vadd.f32 %v639, %v1410
        %v1539 = vadd.f32 %v641, %v1411
        %v1540 = vadd.f32 %v896, %v1412
        %v1541 = vadd.f32 %v898, %v1413
        %v1542 = vadd.f32 %v645, %v1414
        %v1543 = vadd.f32 %v647, %v1415
        %v1544 = vadd.f32 %v902, %v1416
        %v1545 = vadd.f32 %v904, %v1417
        %v1546 = vmul.f32 %v1418, 0.7978846
        %v1547 = vmul.f32 %v1419, 0.7978846
        %v1548 = vmul.f32 %v1420, 0.7978846
        %v1549 = vmul.f32 %v1421, 0.7978846
        %v1550 = vmul.f32 %v1422, 0.7978846
        %v1551 = vmul.f32 %v1423, 0.7978846
        %v1552 = vmul.f32 %v1424, 0.7978846
        %v1553 = vmul.f32 %v1425, 0.7978846
        %v1554 = vmul.f32 %v1426, 0.7978846
        %v1555 = vmul.f32 %v1427, 0.7978846
        %v1556 = vmul.f32 %v1428, 0.7978846
        %v1557 = vmul.f32 %v1429, 0.7978846
        %v1558 = vmul.f32 %v1430, 0.7978846
        %v1559 = vmul.f32 %v1431, 0.7978846
        %v1560 = vmul.f32 %v1432, 0.7978846
        %v1561 = vmul.f32 %v1433, 0.7978846
        %v1562 = vmul.f32 %v1434, 0.7978846
        %v1563 = vmul.f32 %v1435, 0.7978846
        %v1564 = vmul.f32 %v1436, 0.7978846
        %v1565 = vmul.f32 %v1437, 0.7978846
        %v1566 = vmul.f32 %v1438, 0.7978846
        %v1567 = vmul.f32 %v1439, 0.7978846
        %v1568 = vmul.f32 %v1440, 0.7978846
        %v1569 = vmul.f32 %v1441, 0.7978846
        %v1570 = vmul.f32 %v1442, 0.7978846
        %v1571 = vmul.f32 %v1443, 0.7978846
        %v1572 = vmul.f32 %v1444, 0.7978846
        %v1573 = vmul.f32 %v1445, 0.7978846
        %v1574 = vmul.f32 %v1446, 0.7978846
        %v1575 = vmul.f32 %v1447, 0.7978846
        %v1576 = vmul.f32 %v1448, 0.7978846
        %v1577 = vmul.f32 %v1449, 0.7978846
        %v1578 = vmul.f32 %v1450, 0.7978846
        %v1579 = vmul.f32 %v1451, 0.7978846
        %v1580 = vmul.f32 %v1452, 0.7978846
        %v1581 = vmul.f32 %v1453, 0.7978846
        %v1582 = vmul.f32 %v1454, 0.7978846
        %v1583 = vmul.f32 %v1455, 0.7978846
        %v1584 = vmul.f32 %v1456, 0.7978846
        %v1585 = vmul.f32 %v1457, 0.7978846
        %v1586 = vmul.f32 %v1458, 0.7978846
        %v1587 = vmul.f32 %v1459, 0.7978846
        %v1588 = vmul.f32 %v1460, 0.7978846
        %v1589 = vmul.f32 %v1461, 0.7978846
        %v1590 = vmul.f32 %v1462, 0.7978846
        %v1591 = vmul.f32 %v1463, 0.7978846
        %v1592 = vmul.f32 %v1464, 0.7978846
        %v1593 = vmul.f32 %v1465, 0.7978846
        %v1594 = vmul.f32 %v1466, 0.7978846
        %v1595 = vmul.f32 %v1467, 0.7978846
        %v1596 = vmul.f32 %v1468, 0.7978846
        %v1597 = vmul.f32 %v1469, 0.7978846
        %v1598 = vmul.f32 %v1470, 0.7978846
        %v1599 = vmul.f32 %v1471, 0.7978846
        %v1600 = vmul.f32 %v1472, 0.7978846
        %v1601 = vmul.f32 %v1473, 0.7978846
        %v1602 = vmul.f32 %v1474, 0.7978846
        %v1603 = vmul.f32 %v1475, 0.7978846
        %v1604 = vmul.f32 %v1476, 0.7978846
        %v1605 = vmul.f32 %v1477, 0.7978846
        %v1606 = vmul.f32 %v1478, 0.7978846
        %v1607 = vmul.f32 %v1479, 0.7978846
        %v1608 = vmul.f32 %v1480, 0.7978846
        %v1609 = vmul.f32 %v1481, 0.7978846
        %v1610 = vmul.f32 %v1482, 0.7978846
        %v1611 = vmul.f32 %v1483, 0.7978846
        %v1612 = vmul.f32 %v1484, 0.7978846
        %v1613 = vmul.f32 %v1485, 0.7978846
        %v1614 = vmul.f32 %v1486, 0.7978846
        %v1615 = vmul.f32 %v1487, 0.7978846
        %v1616 = vmul.f32 %v1488, 0.7978846
        %v1617 = vmul.f32 %v1489, 0.7978846
        %v1618 = vmul.f32 %v1490, 0.7978846
        %v1619 = vmul.f32 %v1491, 0.7978846
        %v1620 = vmul.f32 %v1492, 0.7978846
        %v1621 = vmul.f32 %v1493, 0.7978846
        %v1622 = vmul.f32 %v1494, 0.7978846
        %v1623 = vmul.f32 %v1495, 0.7978846
        %v1624 = vmul.f32 %v1496, 0.7978846
        %v1625 = vmul.f32 %v1497, 0.7978846
        %v1626 = vmul.f32 %v1498, 0.7978846
        %v1627 = vmul.f32 %v1499, 0.7978846
        %v1628 = vmul.f32 %v1500, 0.7978846
        %v1629 = vmul.f32 %v1501, 0.7978846
        %v1630 = vmul.f32 %v1502, 0.7978846
        %v1631 = vmul.f32 %v1503, 0.7978846
        %v1632 = vmul.f32 %v1504, 0.7978846
        %v1633 = vmul.f32 %v1505, 0.7978846
        %v1634 = vmul.f32 %v1506, 0.7978846
        %v1635 = vmul.f32 %v1507, 0.7978846
        %v1636 = vmul.f32 %v1508, 0.7978846
        %v1637 = vmul.f32 %v1509, 0.7978846
        %v1638 = vmul.f32 %v1510, 0.7978846
        %v1639 = vmul.f32 %v1511, 0.7978846
        %v1640 = vmul.f32 %v1512, 0.7978846
        %v1641 = vmul.f32 %v1513, 0.7978846
        %v1642 = vmul.f32 %v1514, 0.7978846
        %v1643 = vmul.f32 %v1515, 0.7978846
        %v1644 = vmul.f32 %v1516, 0.7978846
        %v1645 = vmul.f32 %v1517, 0.7978846
        %v1646 = vmul.f32 %v1518, 0.7978846
        %v1647 = vmul.f32 %v1519, 0.7978846
        %v1648 = vmul.f32 %v1520, 0.7978846
        %v1649 = vmul.f32 %v1521, 0.7978846
        %v1650 = vmul.f32 %v1522, 0.7978846
        %v1651 = vmul.f32 %v1523, 0.7978846
        %v1652 = vmul.f32 %v1524, 0.7978846
        %v1653 = vmul.f32 %v1525, 0.7978846
        %v1654 = vmul.f32 %v1526, 0.7978846
        %v1655 = vmul.f32 %v1527, 0.7978846
        %v1656 = vmul.f32 %v1528, 0.7978846
        %v1657 = vmul.f32 %v1529, 0.7978846
        %v1658 = vmul.f32 %v1530, 0.7978846
        %v1659 = vmul.f32 %v1531, 0.7978846
        %v1660 = vmul.f32 %v1532, 0.7978846
        %v1661 = vmul.f32 %v1533, 0.7978846
        %v1662 = vmul.f32 %v1534, 0.7978846
        %v1663 = vmul.f32 %v1535, 0.7978846
        %v1664 = vmul.f32 %v1536, 0.7978846
        %v1665 = vmul.f32 %v1537, 0.7978846
        %v1666 = vmul.f32 %v1538, 0.7978846
        %v1667 = vmul.f32 %v1539, 0.7978846
        %v1668 = vmul.f32 %v1540, 0.7978846
        %v1669 = vmul.f32 %v1541, 0.7978846
        %v1670 = vmul.f32 %v1542, 0.7978846
        %v1671 = vmul.f32 %v1543, 0.7978846
        %v1672 = vmul.f32 %v1544, 0.7978846
        %v1673 = vmul.f32 %v1545, 0.7978846
        %v1674 = vtanh.pop %v1546
        %v1675 = vtanh.pop %v1547
        %v1676 = vtanh.pop %v1548
        %v1677 = vtanh.pop %v1549
        %v1678 = vtanh.pop %v1550
        %v1679 = vtanh.pop %v1551
        %v1680 = vtanh.pop %v1552
        %v1681 = vtanh.pop %v1553
        %v1682 = vtanh.pop %v1554
        %v1683 = vtanh.pop %v1555
        %v1684 = vtanh.pop %v1556
        %v1685 = vtanh.pop %v1557
        %v1686 = vtanh.pop %v1558
        %v1687 = vtanh.pop %v1559
        %v1688 = vtanh.pop %v1560
        %v1689 = vtanh.pop %v1561
        %v1690 = vtanh.pop %v1562
        %v1691 = vtanh.pop %v1563
        %v1692 = vtanh.pop %v1564
        %v1693 = vtanh.pop %v1565
        %v1694 = vtanh.pop %v1566
        %v1695 = vtanh.pop %v1567
        %v1696 = vtanh.pop %v1568
        %v1697 = vtanh.pop %v1569
        %v1698 = vtanh.pop %v1570
        %v1699 = vtanh.pop %v1571
        %v1700 = vtanh.pop %v1572
        %v1701 = vtanh.pop %v1573
        %v1702 = vtanh.pop %v1574
        %v1703 = vtanh.pop %v1575
        %v1704 = vtanh.pop %v1576
        %v1705 = vtanh.pop %v1577
        %v1706 = vtanh.pop %v1578
        %v1707 = vtanh.pop %v1579
        %v1708 = vtanh.pop %v1580
        %v1709 = vtanh.pop %v1581
        %v1710 = vtanh.pop %v1582
        %v1711 = vtanh.pop %v1583
        %v1712 = vtanh.pop %v1584
        %v1713 = vtanh.pop %v1585
        %v1714 = vtanh.pop %v1586
        %v1715 = vtanh.pop %v1587
        %v1716 = vtanh.pop %v1588
        %v1717 = vtanh.pop %v1589
        %v1718 = vtanh.pop %v1590
        %v1719 = vtanh.pop %v1591
        %v1720 = vtanh.pop %v1592
        %v1721 = vtanh.pop %v1593
        %v1722 = vtanh.pop %v1594
        %v1723 = vtanh.pop %v1595
        %v1724 = vtanh.pop %v1596
        %v1725 = vtanh.pop %v1597
        %v1726 = vtanh.pop %v1598
        %v1727 = vtanh.pop %v1599
        %v1728 = vtanh.pop %v1600
        %v1729 = vtanh.pop %v1601
        %v1730 = vtanh.pop %v1602
        %v1731 = vtanh.pop %v1603
        %v1732 = vtanh.pop %v1604
        %v1733 = vtanh.pop %v1605
        %v1734 = vtanh.pop %v1606
        %v1735 = vtanh.pop %v1607
        %v1736 = vtanh.pop %v1608
        %v1737 = vtanh.pop %v1609
        %v1738 = vtanh.pop %v1610
        %v1739 = vtanh.pop %v1611
        %v1740 = vtanh.pop %v1612
        %v1741 = vtanh.pop %v1613
        %v1742 = vtanh.pop %v1614
        %v1743 = vtanh.pop %v1615
        %v1744 = vtanh.pop %v1616
        %v1745 = vtanh.pop %v1617
        %v1746 = vtanh.pop %v1618
        %v1747 = vtanh.pop %v1619
        %v1748 = vtanh.pop %v1620
        %v1749 = vtanh.pop %v1621
        %v1750 = vtanh.pop %v1622
        %v1751 = vtanh.pop %v1623
        %v1752 = vtanh.pop %v1624
        %v1753 = vtanh.pop %v1625
        %v1754 = vtanh.pop %v1626
        %v1755 = vtanh.pop %v1627
        %v1756 = vtanh.pop %v1628
        %v1757 = vtanh.pop %v1629
        %v1758 = vtanh.pop %v1630
        %v1759 = vtanh.pop %v1631
        %v1760 = vtanh.pop %v1632
        %v1761 = vtanh.pop %v1633
        %v1762 = vtanh.pop %v1634
        %v1763 = vtanh.pop %v1635
        %v1764 = vtanh.pop %v1636
        %v1765 = vtanh.pop %v1637
        %v1766 = vtanh.pop %v1638
        %v1767 = vtanh.pop %v1639
        %v1768 = vtanh.pop %v1640
        %v1769 = vtanh.pop %v1641
        %v1770 = vtanh.pop %v1642
        %v1771 = vtanh.pop %v1643
        %v1772 = vtanh.pop %v1644
        %v1773 = vtanh.pop %v1645
        %v1774 = vtanh.pop %v1646
        %v1775 = vtanh.pop %v1647
        %v1776 = vtanh.pop %v1648
        %v1777 = vtanh.pop %v1649
        %v1778 = vtanh.pop %v1650
        %v1779 = vtanh.pop %v1651
        %v1780 = vtanh.pop %v1652
        %v1781 = vtanh.pop %v1653
        %v1782 = vtanh.pop %v1654
        %v1783 = vtanh.pop %v1655
        %v1784 = vtanh.pop %v1656
        %v1785 = vtanh.pop %v1657
        %v1786 = vtanh.pop %v1658
        %v1787 = vtanh.pop %v1659
        %v1788 = vtanh.pop %v1660
        %v1789 = vtanh.pop %v1661
        %v1790 = vtanh.pop %v1662
        %v1791 = vtanh.pop %v1663
        %v1792 = vtanh.pop %v1664
        %v1793 = vtanh.pop %v1665
        %v1794 = vtanh.pop %v1666
        %v1795 = vtanh.pop %v1667
        %v1796 = vtanh.pop %v1668
        %v1797 = vtanh.pop %v1669
        %v1798 = vtanh.pop %v1670
        %v1799 = vtanh.pop %v1671
        %v1800 = vtanh.pop %v1672
        %v1801 = vtanh.pop %v1673
        %v1802 = vadd.f32 %v1674, 1.0
        %v1803 = vadd.f32 %v1675, 1.0
        %v1804 = vadd.f32 %v1676, 1.0
        %v1805 = vadd.f32 %v1677, 1.0
        %v1806 = vadd.f32 %v1678, 1.0
        %v1807 = vadd.f32 %v1679, 1.0
        %v1808 = vadd.f32 %v1680, 1.0
        %v1809 = vadd.f32 %v1681, 1.0
        %v1810 = vadd.f32 %v1682, 1.0
        %v1811 = vadd.f32 %v1683, 1.0
        %v1812 = vadd.f32 %v1684, 1.0
        %v1813 = vadd.f32 %v1685, 1.0
        %v1814 = vadd.f32 %v1686, 1.0
        %v1815 = vadd.f32 %v1687, 1.0
        %v1816 = vadd.f32 %v1688, 1.0
        %v1817 = vadd.f32 %v1689, 1.0
        %v1818 = vadd.f32 %v1690, 1.0
        %v1819 = vadd.f32 %v1691, 1.0
        %v1820 = vadd.f32 %v1692, 1.0
        %v1821 = vadd.f32 %v1693, 1.0
        %v1822 = vadd.f32 %v1694, 1.0
        %v1823 = vadd.f32 %v1695, 1.0
        %v1824 = vadd.f32 %v1696, 1.0
        %v1825 = vadd.f32 %v1697, 1.0
        %v1826 = vadd.f32 %v1698, 1.0
        %v1827 = vadd.f32 %v1699, 1.0
        %v1828 = vadd.f32 %v1700, 1.0
        %v1829 = vadd.f32 %v1701, 1.0
        %v1830 = vadd.f32 %v1702, 1.0
        %v1831 = vadd.f32 %v1703, 1.0
        %v1832 = vadd.f32 %v1704, 1.0
        %v1833 = vadd.f32 %v1705, 1.0
        %v1834 = vadd.f32 %v1706, 1.0
        %v1835 = vadd.f32 %v1707, 1.0
        %v1836 = vadd.f32 %v1708, 1.0
        %v1837 = vadd.f32 %v1709, 1.0
        %v1838 = vadd.f32 %v1710, 1.0
        %v1839 = vadd.f32 %v1711, 1.0
        %v1840 = vadd.f32 %v1712, 1.0
        %v1841 = vadd.f32 %v1713, 1.0
        %v1842 = vadd.f32 %v1714, 1.0
        %v1843 = vadd.f32 %v1715, 1.0
        %v1844 = vadd.f32 %v1716, 1.0
        %v1845 = vadd.f32 %v1717, 1.0
        %v1846 = vadd.f32 %v1718, 1.0
        %v1847 = vadd.f32 %v1719, 1.0
        %v1848 = vadd.f32 %v1720, 1.0
        %v1849 = vadd.f32 %v1721, 1.0
        %v1850 = vadd.f32 %v1722, 1.0
        %v1851 = vadd.f32 %v1723, 1.0
        %v1852 = vadd.f32 %v1724, 1.0
        %v1853 = vadd.f32 %v1725, 1.0
        %v1854 = vadd.f32 %v1726, 1.0
        %v1855 = vadd.f32 %v1727, 1.0
        %v1856 = vadd.f32 %v1728, 1.0
        %v1857 = vadd.f32 %v1729, 1.0
        %v1858 = vadd.f32 %v1730, 1.0
        %v1859 = vadd.f32 %v1731, 1.0
        %v1860 = vadd.f32 %v1732, 1.0
        %v1861 = vadd.f32 %v1733, 1.0
        %v1862 = vadd.f32 %v1734, 1.0
        %v1863 = vadd.f32 %v1735, 1.0
        %v1864 = vadd.f32 %v1736, 1.0
        %v1865 = vadd.f32 %v1737, 1.0
        %v1866 = vadd.f32 %v1738, 1.0
        %v1867 = vadd.f32 %v1739, 1.0
        %v1868 = vadd.f32 %v1740, 1.0
        %v1869 = vadd.f32 %v1741, 1.0
        %v1870 = vadd.f32 %v1742, 1.0
        %v1871 = vadd.f32 %v1743, 1.0
        %v1872 = vadd.f32 %v1744, 1.0
        %v1873 = vadd.f32 %v1745, 1.0
        %v1874 = vadd.f32 %v1746, 1.0
        %v1875 = vadd.f32 %v1747, 1.0
        %v1876 = vadd.f32 %v1748, 1.0
        %v1877 = vadd.f32 %v1749, 1.0
        %v1878 = vadd.f32 %v1750, 1.0
        %v1879 = vadd.f32 %v1751, 1.0
        %v1880 = vadd.f32 %v1752, 1.0
        %v1881 = vadd.f32 %v1753, 1.0
        %v1882 = vadd.f32 %v1754, 1.0
        %v1883 = vadd.f32 %v1755, 1.0
        %v1884 = vadd.f32 %v1756, 1.0
        %v1885 = vadd.f32 %v1757, 1.0
        %v1886 = vadd.f32 %v1758, 1.0
        %v1887 = vadd.f32 %v1759, 1.0
        %v1888 = vadd.f32 %v1760, 1.0
        %v1889 = vadd.f32 %v1761, 1.0
        %v1890 = vadd.f32 %v1762, 1.0
        %v1891 = vadd.f32 %v1763, 1.0
        %v1892 = vadd.f32 %v1764, 1.0
        %v1893 = vadd.f32 %v1765, 1.0
        %v1894 = vadd.f32 %v1766, 1.0
        %v1895 = vadd.f32 %v1767, 1.0
        %v1896 = vadd.f32 %v1768, 1.0
        %v1897 = vadd.f32 %v1769, 1.0
        %v1898 = vadd.f32 %v1770, 1.0
        %v1899 = vadd.f32 %v1771, 1.0
        %v1900 = vadd.f32 %v1772, 1.0
        %v1901 = vadd.f32 %v1773, 1.0
        %v1902 = vadd.f32 %v1774, 1.0
        %v1903 = vadd.f32 %v1775, 1.0
        %v1904 = vadd.f32 %v1776, 1.0
        %v1905 = vadd.f32 %v1777, 1.0
        %v1906 = vadd.f32 %v1778, 1.0
        %v1907 = vadd.f32 %v1779, 1.0
        %v1908 = vadd.f32 %v1780, 1.0
        %v1909 = vadd.f32 %v1781, 1.0
        %v1910 = vadd.f32 %v1782, 1.0
        %v1911 = vadd.f32 %v1783, 1.0
        %v1912 = vadd.f32 %v1784, 1.0
        %v1913 = vadd.f32 %v1785, 1.0
        %v1914 = vadd.f32 %v1786, 1.0
        %v1915 = vadd.f32 %v1787, 1.0
        %v1916 = vadd.f32 %v1788, 1.0
        %v1917 = vadd.f32 %v1789, 1.0
        %v1918 = vadd.f32 %v1790, 1.0
        %v1919 = vadd.f32 %v1791, 1.0
        %v1920 = vadd.f32 %v1792, 1.0
        %v1921 = vadd.f32 %v1793, 1.0
        %v1922 = vadd.f32 %v1794, 1.0
        %v1923 = vadd.f32 %v1795, 1.0
        %v1924 = vadd.f32 %v1796, 1.0
        %v1925 = vadd.f32 %v1797, 1.0
        %v1926 = vadd.f32 %v1798, 1.0
        %v1927 = vadd.f32 %v1799, 1.0
        %v1928 = vadd.f32 %v1800, 1.0
        %v1929 = vadd.f32 %v1801, 1.0
        %v1930 = vmul.f32 %v906, %v1802
        %v1931 = vmul.f32 %v907, %v1803
        %v1932 = vmul.f32 %v908, %v1804
        %v1933 = vmul.f32 %v909, %v1805
        %v1934 = vmul.f32 %v910, %v1806
        %v1935 = vmul.f32 %v911, %v1807
        %v1936 = vmul.f32 %v912, %v1808
        %v1937 = vmul.f32 %v913, %v1809
        %v1938 = vmul.f32 %v914, %v1810
        %v1939 = vmul.f32 %v915, %v1811
        %v1940 = vmul.f32 %v916, %v1812
        %v1941 = vmul.f32 %v917, %v1813
        %v1942 = vmul.f32 %v918, %v1814
        %v1943 = vmul.f32 %v919, %v1815
        %v1944 = vmul.f32 %v920, %v1816
        %v1945 = vmul.f32 %v921, %v1817
        %v1946 = vmul.f32 %v922, %v1818
        %v1947 = vmul.f32 %v923, %v1819
        %v1948 = vmul.f32 %v924, %v1820
        %v1949 = vmul.f32 %v925, %v1821
        %v1950 = vmul.f32 %v926, %v1822
        %v1951 = vmul.f32 %v927, %v1823
        %v1952 = vmul.f32 %v928, %v1824
        %v1953 = vmul.f32 %v929, %v1825
        %v1954 = vmul.f32 %v930, %v1826
        %v1955 = vmul.f32 %v931, %v1827
        %v1956 = vmul.f32 %v932, %v1828
        %v1957 = vmul.f32 %v933, %v1829
        %v1958 = vmul.f32 %v934, %v1830
        %v1959 = vmul.f32 %v935, %v1831
        %v1960 = vmul.f32 %v936, %v1832
        %v1961 = vmul.f32 %v937, %v1833
        %v1962 = vmul.f32 %v938, %v1834
        %v1963 = vmul.f32 %v939, %v1835
        %v1964 = vmul.f32 %v940, %v1836
        %v1965 = vmul.f32 %v941, %v1837
        %v1966 = vmul.f32 %v942, %v1838
        %v1967 = vmul.f32 %v943, %v1839
        %v1968 = vmul.f32 %v944, %v1840
        %v1969 = vmul.f32 %v945, %v1841
        %v1970 = vmul.f32 %v946, %v1842
        %v1971 = vmul.f32 %v947, %v1843
        %v1972 = vmul.f32 %v948, %v1844
        %v1973 = vmul.f32 %v949, %v1845
        %v1974 = vmul.f32 %v950, %v1846
        %v1975 = vmul.f32 %v951, %v1847
        %v1976 = vmul.f32 %v952, %v1848
        %v1977 = vmul.f32 %v953, %v1849
        %v1978 = vmul.f32 %v954, %v1850
        %v1979 = vmul.f32 %v955, %v1851
        %v1980 = vmul.f32 %v956, %v1852
        %v1981 = vmul.f32 %v957, %v1853
        %v1982 = vmul.f32 %v958, %v1854
        %v1983 = vmul.f32 %v959, %v1855
        %v1984 = vmul.f32 %v960, %v1856
        %v1985 = vmul.f32 %v961, %v1857
        %v1986 = vmul.f32 %v962, %v1858
        %v1987 = vmul.f32 %v963, %v1859
        %v1988 = vmul.f32 %v964, %v1860
        %v1989 = vmul.f32 %v965, %v1861
        %v1990 = vmul.f32 %v966, %v1862
        %v1991 = vmul.f32 %v967, %v1863
        %v1992 = vmul.f32 %v968, %v1864
        %v1993 = vmul.f32 %v969, %v1865
        %v1994 = vmul.f32 %v970, %v1866
        %v1995 = vmul.f32 %v971, %v1867
        %v1996 = vmul.f32 %v972, %v1868
        %v1997 = vmul.f32 %v973, %v1869
        %v1998 = vmul.f32 %v974, %v1870
        %v1999 = vmul.f32 %v975, %v1871
        %v2000 = vmul.f32 %v976, %v1872
        %v2001 = vmul.f32 %v977, %v1873
        %v2002 = vmul.f32 %v978, %v1874
        %v2003 = vmul.f32 %v979, %v1875
        %v2004 = vmul.f32 %v980, %v1876
        %v2005 = vmul.f32 %v981, %v1877
        %v2006 = vmul.f32 %v982, %v1878
        %v2007 = vmul.f32 %v983, %v1879
        %v2008 = vmul.f32 %v984, %v1880
        %v2009 = vmul.f32 %v985, %v1881
        %v2010 = vmul.f32 %v986, %v1882
        %v2011 = vmul.f32 %v987, %v1883
        %v2012 = vmul.f32 %v988, %v1884
        %v2013 = vmul.f32 %v989, %v1885
        %v2014 = vmul.f32 %v990, %v1886
        %v2015 = vmul.f32 %v991, %v1887
        %v2016 = vmul.f32 %v992, %v1888
        %v2017 = vmul.f32 %v993, %v1889
        %v2018 = vmul.f32 %v994, %v1890
        %v2019 = vmul.f32 %v995, %v1891
        %v2020 = vmul.f32 %v996, %v1892
        %v2021 = vmul.f32 %v997, %v1893
        %v2022 = vmul.f32 %v998, %v1894
        %v2023 = vmul.f32 %v999, %v1895
        %v2024 = vmul.f32 %v1000, %v1896
        %v2025 = vmul.f32 %v1001, %v1897
        %v2026 = vmul.f32 %v1002, %v1898
        %v2027 = vmul.f32 %v1003, %v1899
        %v2028 = vmul.f32 %v1004, %v1900
        %v2029 = vmul.f32 %v1005, %v1901
        %v2030 = vmul.f32 %v1006, %v1902
        %v2031 = vmul.f32 %v1007, %v1903
        %v2032 = vmul.f32 %v1008, %v1904
        %v2033 = vmul.f32 %v1009, %v1905
        %v2034 = vmul.f32 %v1010, %v1906
        %v2035 = vmul.f32 %v1011, %v1907
        %v2036 = vmul.f32 %v1012, %v1908
        %v2037 = vmul.f32 %v1013, %v1909
        %v2038 = vmul.f32 %v1014, %v1910
        %v2039 = vmul.f32 %v1015, %v1911
        %v2040 = vmul.f32 %v1016, %v1912
        %v2041 = vmul.f32 %v1017, %v1913
        %v2042 = vmul.f32 %v1018, %v1914
        %v2043 = vmul.f32 %v1019, %v1915
        %v2044 = vmul.f32 %v1020, %v1916
        %v2045 = vmul.f32 %v1021, %v1917
        %v2046 = vmul.f32 %v1022, %v1918
        %v2047 = vmul.f32 %v1023, %v1919
        %v2048 = vmul.f32 %v1024, %v1920
        %v2049 = vmul.f32 %v1025, %v1921
        %v2050 = vmul.f32 %v1026, %v1922
        %v2051 = vmul.f32 %v1027, %v1923
        %v2052 = vmul.f32 %v1028, %v1924
        %v2053 = vmul.f32 %v1029, %v1925
        %v2054 = vmul.f32 %v1030, %v1926
        %v2055 = vmul.f32 %v1031, %v1927
        %v2056 = vmul.f32 %v1032, %v1928
        %v2057 = vmul.f32 %v1033, %v1929
        %v2058 = vld [vmem:[#allocation7] sm:$0xff]
        %v2059 = vld [vmem:[#allocation7 + $0x8] sm:$0xff]
        %v2060 = vld [vmem:[#allocation7 + $0x10] sm:$0xff]
        %v2061 = vld [vmem:[#allocation7 + $0x18] sm:$0xff]
        %v2062 = vld [vmem:[#allocation7 + $0x20] sm:$0xff]
        %v2063 = vld [vmem:[#allocation7 + $0x28] sm:$0xff]
        %v2064 = vld [vmem:[#allocation7 + $0x30] sm:$0xff]
        %v2065 = vld [vmem:[#allocation7 + $0x38] sm:$0xff]
        %v2066 = vld [vmem:[#allocation7 + $0x40] sm:$0xff]
        %v2067 = vld [vmem:[#allocation7 + $0x48] sm:$0xff]
        %v2068 = vld [vmem:[#allocation7 + $0x50] sm:$0xff]
        %v2069 = vld [vmem:[#allocation7 + $0x58] sm:$0xff]
        %v2070 = vld [vmem:[#allocation7 + $0x60] sm:$0xff]
        %v2071 = vld [vmem:[#allocation7 + $0x68] sm:$0xff]
        %v2072 = vld [vmem:[#allocation7 + $0x70] sm:$0xff]
        %v2073 = vld [vmem:[#allocation7 + $0x78] sm:$0xff]
        %v2074 = vld [vmem:[#allocation7 + $0x80] sm:$0xff]
        %v2075 = vld [vmem:[#allocation7 + $0x88] sm:$0xff]
        %v2076 = vld [vmem:[#allocation7 + $0x90] sm:$0xff]
        %v2077 = vld [vmem:[#allocation7 + $0x98] sm:$0xff]
        %v2078 = vld [vmem:[#allocation7 + $0xa0] sm:$0xff]
        %v2079 = vld [vmem:[#allocation7 + $0xa8] sm:$0xff]
        %v2080 = vld [vmem:[#allocation7 + $0xb0] sm:$0xff]
        %v2081 = vld [vmem:[#allocation7 + $0xb8] sm:$0xff]
        %v2082 = vld [vmem:[#allocation7 + $0xc0] sm:$0xff]
        %v2083 = vld [vmem:[#allocation7 + $0xc8] sm:$0xff]
        %v2084 = vld [vmem:[#allocation7 + $0xd0] sm:$0xff]
        %v2085 = vld [vmem:[#allocation7 + $0xd8] sm:$0xff]
        %v2086 = vld [vmem:[#allocation7 + $0xe0] sm:$0xff]
        %v2087 = vld [vmem:[#allocation7 + $0xe8] sm:$0xff]
        %v2088 = vld [vmem:[#allocation7 + $0xf0] sm:$0xff]
        %v2089 = vld [vmem:[#allocation7 + $0xf8] sm:$0xff]
        %v2090 = vld [vmem:[#allocation7 + $0x100] sm:$0xff]
        %v2091 = vld [vmem:[#allocation7 + $0x108] sm:$0xff]
        %v2092 = vld [vmem:[#allocation7 + $0x110] sm:$0xff]
        %v2093 = vld [vmem:[#allocation7 + $0x118] sm:$0xff]
        %v2094 = vld [vmem:[#allocation7 + $0x120] sm:$0xff]
        %v2095 = vld [vmem:[#allocation7 + $0x128] sm:$0xff]
        %v2096 = vld [vmem:[#allocation7 + $0x130] sm:$0xff]
        %v2097 = vld [vmem:[#allocation7 + $0x138] sm:$0xff]
        %v2098 = vld [vmem:[#allocation7 + $0x140] sm:$0xff]
        %v2099 = vld [vmem:[#allocation7 + $0x148] sm:$0xff]
        %v2100 = vld [vmem:[#allocation7 + $0x150] sm:$0xff]
        %v2101 = vld [vmem:[#allocation7 + $0x158] sm:$0xff]
        %v2102 = vld [vmem:[#allocation7 + $0x160] sm:$0xff]
        %v2103 = vld [vmem:[#allocation7 + $0x168] sm:$0xff]
        %v2104 = vld [vmem:[#allocation7 + $0x170] sm:$0xff]
        %v2105 = vld [vmem:[#allocation7 + $0x178] sm:$0xff]
        %v2106 = vld [vmem:[#allocation7 + $0x180] sm:$0xff]
        %v2107 = vld [vmem:[#allocation7 + $0x188] sm:$0xff]
        %v2108 = vld [vmem:[#allocation7 + $0x190] sm:$0xff]
        %v2109 = vld [vmem:[#allocation7 + $0x198] sm:$0xff]
        %v2110 = vld [vmem:[#allocation7 + $0x1a0] sm:$0xff]
        %v2111 = vld [vmem:[#allocation7 + $0x1a8] sm:$0xff]
        %v2112 = vld [vmem:[#allocation7 + $0x1b0] sm:$0xff]
        %v2113 = vld [vmem:[#allocation7 + $0x1b8] sm:$0xff]
        %v2114 = vld [vmem:[#allocation7 + $0x1c0] sm:$0xff]
        %v2115 = vld [vmem:[#allocation7 + $0x1c8] sm:$0xff]
        %v2116 = vld [vmem:[#allocation7 + $0x1d0] sm:$0xff]
        %v2117 = vld [vmem:[#allocation7 + $0x1d8] sm:$0xff]
        %v2118 = vld [vmem:[#allocation7 + $0x1e0] sm:$0xff]
        %v2119 = vld [vmem:[#allocation7 + $0x1e8] sm:$0xff]
        %v2120 = vld [vmem:[#allocation7 + $0x1f0] sm:$0xff]
        %v2121 = vld [vmem:[#allocation7 + $0x1f8] sm:$0xff]
        %v2122 = vld [vmem:[%s4] sm:$0x1]
        %v2124 = vlaneseq
        %v2125 = vshrl.u32 %v2124, 7
        %v2126 = vsub.s32 0, %v2125
        %v2127 = vrot.slane %v2122, %v2126
        %2129 = vmatprep.subr.mxu0 0.0
        %2130 = vmatpush1.msra.mxu0 %v2058
        %2131 = vmatprep.subr.mxu0 0.0
        %2132 = vmatpush1.msra.mxu0 %v2059
        %2133 = vmatprep.subr.mxu0 0.0
        %2134 = vmatpush1.msra.mxu0 %v2060
        %2135 = vmatprep.subr.mxu0 0.0
        %2136 = vmatpush1.msra.mxu0 %v2061
        %2137 = vmatprep.subr.mxu0 0.0
        %2138 = vmatpush1.msra.mxu0 %v2062
        %2139 = vmatprep.subr.mxu0 0.0
        %2140 = vmatpush1.msra.mxu0 %v2063
        %2141 = vmatprep.subr.mxu0 0.0
        %2142 = vmatpush1.msra.mxu0 %v2064
        %2143 = vmatprep.subr.mxu0 0.0
        %2144 = vmatpush1.msra.mxu0 %v2065
        %2145 = vmatprep.subr.mxu0 0.0
        %2146 = vmatpush1.msra.mxu0 %v2066
        %2147 = vmatprep.subr.mxu0 0.0
        %2148 = vmatpush1.msra.mxu0 %v2067
        %2149 = vmatprep.subr.mxu0 0.0
        %2150 = vmatpush1.msra.mxu0 %v2068
        %2151 = vmatprep.subr.mxu0 0.0
        %2152 = vmatpush1.msra.mxu0 %v2069
        %2153 = vmatprep.subr.mxu0 0.0
        %2154 = vmatpush1.msra.mxu0 %v2070
        %2155 = vmatprep.subr.mxu0 0.0
        %2156 = vmatpush1.msra.mxu0 %v2071
        %2157 = vmatprep.subr.mxu0 0.0
        %2158 = vmatpush1.msra.mxu0 %v2072
        %2159 = vmatprep.subr.mxu0 0.0
        %2160 = vmatpush1.msra.mxu0 %v2073
        %2161 = vmatprep.subr.mxu0 0.0
        %2162 = vmatpush1.msra.mxu0 %v2074
        %2163 = vmatprep.subr.mxu0 0.0
        %2164 = vmatpush1.msra.mxu0 %v2075
        %2165 = vmatprep.subr.mxu0 0.0
        %2166 = vmatpush1.msra.mxu0 %v2076
        %2167 = vmatprep.subr.mxu0 0.0
        %2168 = vmatpush1.msra.mxu0 %v2077
        %2169 = vmatprep.subr.mxu0 0.0
        %2170 = vmatpush1.msra.mxu0 %v2078
        %2171 = vmatprep.subr.mxu0 0.0
        %2172 = vmatpush1.msra.mxu0 %v2079
        %2173 = vmatprep.subr.mxu0 0.0
        %2174 = vmatpush1.msra.mxu0 %v2080
        %2175 = vmatprep.subr.mxu0 0.0
        %2176 = vmatpush1.msra.mxu0 %v2081
        %2177 = vmatprep.subr.mxu0 0.0
        %2178 = vmatpush1.msra.mxu0 %v2082
        %2179 = vmatprep.subr.mxu0 0.0
        %2180 = vmatpush1.msra.mxu0 %v2083
        %2181 = vmatprep.subr.mxu0 0.0
        %2182 = vmatpush1.msra.mxu0 %v2084
        %2183 = vmatprep.subr.mxu0 0.0
        %2184 = vmatpush1.msra.mxu0 %v2085
        %2185 = vmatprep.subr.mxu0 0.0
        %2186 = vmatpush1.msra.mxu0 %v2086
        %2187 = vmatprep.subr.mxu0 0.0
        %2188 = vmatpush1.msra.mxu0 %v2087
        %2189 = vmatprep.subr.mxu0 0.0
        %2190 = vmatpush1.msra.mxu0 %v2088
        %2191 = vmatprep.subr.mxu0 0.0
        %2192 = vmatpush1.msra.mxu0 %v2089
        %2193 = vmatprep.mubr.f32.mxu0 %v1931
        %2194 = vmatmul.mubr.f32.gmra.mrb[0].mxu0 %v1930
        %v2195 = vpop.f32.mrb[0].mxu0
        %v2196 = vadd.f32 %v2127, %v2195
        %v2197 = vpop.f32.mrb[0].mxu0
        %2198 = vmatprep.mubr.f32.mxu0 %v1935
        %2199 = vmatmul.mubr.f32.gmra.mrb[0].mxu0 %v1934
        %v2200 = vpop.f32.mrb[0].mxu0
        %v2201 = vadd.f32 %v2127, %v2200
        %v2202 = vpop.f32.mrb[0].mxu0
        %2203 = vmatprep.mubr.f32.mxu0 %v1939
        %2204 = vmatmul.mubr.f32.gmra.mrb[0].mxu0 %v1938
        %v2205 = vpop.f32.mrb[0].mxu0
        %v2206 = vadd.f32 %v2127, %v2205
        %v2207 = vpop.f32.mrb[0].mxu0
        %2208 = vmatprep.mubr.f32.mxu0 %v1943
        %2209 = vmatmul.mubr.f32.gmra.mrb[0].mxu0 %v1942
        %v2210 = vpop.f32.mrb[0].mxu0
        %v2211 = vadd.f32 %v2127, %v2210
        %v2212 = vpop.f32.mrb[0].mxu0
        %2213 = vmatprep.mubr.f32.mxu0 %v1947
        %2214 = vmatmul.mubr.f32.gmra.mrb[0].mxu0 %v1946
        %v2215 = vpop.f32.mrb[0].mxu0
        %v2216 = vadd.f32 %v2127, %v2215
        %v2217 = vpop.f32.mrb[0].mxu0
        %2218 = vmatprep.mubr.f32.mxu0 %v1951
        %2219 = vmatmul.mubr.f32.gmra.mrb[0].mxu0 %v1950
        %v2220 = vpop.f32.mrb[0].mxu0
        %v2221 = vadd.f32 %v2127, %v2220
        %v2222 = vpop.f32.mrb[0].mxu0
        %2223 = vmatprep.mubr.f32.mxu0 %v1955
        %2224 = vmatmul.mubr.f32.gmra.mrb[0].mxu0 %v1954
        %v2225 = vpop.f32.mrb[0].mxu0
        %v2226 = vadd.f32 %v2127, %v2225
        %v2227 = vpop.f32.mrb[0].mxu0
        %2228 = vmatprep.mubr.f32.mxu0 %v1959
        %2229 = vmatmul.mubr.f32.gmra.mrb[0].mxu0 %v1958
        %v2230 = vpop.f32.mrb[0].mxu0
        %v2231 = vadd.f32 %v2127, %v2230
        %v2232 = vpop.f32.mrb[0].mxu0
        %2233 = vmatprep.mubr.f32.mxu0 %v1963
        %2234 = vmatmul.mubr.f32.gmra.mrb[0].mxu0 %v1962
        %v2235 = vpop.f32.mrb[0].mxu0
        %v2236 = vadd.f32 %v2127, %v2235
        %v2237 = vpop.f32.mrb[0].mxu0
        %2238 = vmatprep.mubr.f32.mxu0 %v1967
        %2239 = vmatmul.mubr.f32.gmra.mrb[0].mxu0 %v1966
        %v2240 = vpop.f32.mrb[0].mxu0
        %v2241 = vadd.f32 %v2127, %v2240
        %v2242 = vpop.f32.mrb[0].mxu0
        %2243 = vmatprep.mubr.f32.mxu0 %v1971
        %2244 = vmatmul.mubr.f32.gmra.mrb[0].mxu0 %v1970
        %v2245 = vpop.f32.mrb[0].mxu0
        %v2246 = vadd.f32 %v2127, %v2245
        %v2247 = vpop.f32.mrb[0].mxu0
        %2248 = vmatprep.mubr.f32.mxu0 %v1975
        %2249 = vmatmul.mubr.f32.gmra.mrb[0].mxu0 %v1974
        %v2250 = vpop.f32.mrb[0].mxu0
        %v2251 = vadd.f32 %v2127, %v2250
        %v2252 = vpop.f32.mrb[0].mxu0
        %2253 = vmatprep.mubr.f32.mxu0 %v1979
        %2254 = vmatmul.mubr.f32.gmra.mrb[0].mxu0 %v1978
        %v2255 = vpop.f32.mrb[0].mxu0
        %v2256 = vadd.f32 %v2127, %v2255
        %v2257 = vpop.f32.mrb[0].mxu0
        %2258 = vmatprep.mubr.f32.mxu0 %v1983
        %2259 = vmatmul.mubr.f32.gmra.mrb[0].mxu0 %v1982
        %v2260 = vpop.f32.mrb[0].mxu0
        %v2261 = vadd.f32 %v2127, %v2260
        %v2262 = vpop.f32.mrb[0].mxu0
        %2263 = vmatprep.mubr.f32.mxu0 %v1987
        %2264 = vmatmul.mubr.f32.gmra.mrb[0].mxu0 %v1986
        %v2265 = vpop.f32.mrb[0].mxu0
        %v2266 = vadd.f32 %v2127, %v2265
        %v2267 = vpop.f32.mrb[0].mxu0
        %2268 = vmatprep.mubr.f32.mxu0 %v1991
        %2269 = vmatmul.mubr.f32.gmra.mrb[0].mxu0 %v1990
        %v2270 = vpop.f32.mrb[0].mxu0
        %v2271 = vadd.f32 %v2127, %v2270
        %v2272 = vpop.f32.mrb[0].mxu0
        %2273 = vmatprep.mubr.f32.mxu0 %v1995
        %2274 = vmatmul.mubr.f32.gmra.mrb[0].mxu0 %v1994
        %v2275 = vpop.f32.mrb[0].mxu0
        %v2276 = vadd.f32 %v2127, %v2275
        %v2277 = vpop.f32.mrb[0].mxu0
        %2278 = vmatprep.mubr.f32.mxu0 %v1999
        %2279 = vmatmul.mubr.f32.gmra.mrb[0].mxu0 %v1998
        %v2280 = vpop.f32.mrb[0].mxu0
        %v2281 = vadd.f32 %v2127, %v2280
        %v2282 = vpop.f32.mrb[0].mxu0
        %2283 = vmatprep.mubr.f32.mxu0 %v2003
        %2284 = vmatmul.mubr.f32.gmra.mrb[0].mxu0 %v2002
        %v2285 = vpop.f32.mrb[0].mxu0
        %v2286 = vadd.f32 %v2127, %v2285
        %v2287 = vpop.f32.mrb[0].mxu0
        %2288 = vmatprep.mubr.f32.mxu0 %v2007
        %2289 = vmatmul.mubr.f32.gmra.mrb[0].mxu0 %v2006
        %v2290 = vpop.f32.mrb[0].mxu0
        %v2291 = vadd.f32 %v2127, %v2290
        %v2292 = vpop.f32.mrb[0].mxu0
        %2293 = vmatprep.mubr.f32.mxu0 %v2011
        %2294 = vmatmul.mubr.f32.gmra.mrb[0].mxu0 %v2010
        %v2295 = vpop.f32.mrb[0].mxu0
        %v2296 = vadd.f32 %v2127, %v2295
        %v2297 = vpop.f32.mrb[0].mxu0
        %2298 = vmatprep.mubr.f32.mxu0 %v2015
        %2299 = vmatmul.mubr.f32.gmra.mrb[0].mxu0 %v2014
        %v2300 = vpop.f32.mrb[0].mxu0
        %v2301 = vadd.f32 %v2127, %v2300
        %v2302 = vpop.f32.mrb[0].mxu0
        %2303 = vmatprep.mubr.f32.mxu0 %v2019
        %2304 = vmatmul.mubr.f32.gmra.mrb[0].mxu0 %v2018
        %v2305 = vpop.f32.mrb[0].mxu0
        %v2306 = vadd.f32 %v2127, %v2305
        %v2307 = vpop.f32.mrb[0].mxu0
        %2308 = vmatprep.mubr.f32.mxu0 %v2023
        %2309 = vmatmul.mubr.f32.gmra.mrb[0].mxu0 %v2022
        %v2310 = vpop.f32.mrb[0].mxu0
        %v2311 = vadd.f32 %v2127, %v2310
        %v2312 = vpop.f32.mrb[0].mxu0
        %2313 = vmatprep.mubr.f32.mxu0 %v2027
        %2314 = vmatmul.mubr.f32.gmra.mrb[0].mxu0 %v2026
        %v2315 = vpop.f32.mrb[0].mxu0
        %v2316 = vadd.f32 %v2127, %v2315
        %v2317 = vpop.f32.mrb[0].mxu0
        %2318 = vmatprep.mubr.f32.mxu0 %v2031
        %2319 = vmatmul.mubr.f32.gmra.mrb[0].mxu0 %v2030
        %v2320 = vpop.f32.mrb[0].mxu0
        %v2321 = vadd.f32 %v2127, %v2320
        %v2322 = vpop.f32.mrb[0].mxu0
        %2323 = vmatprep.mubr.f32.mxu0 %v2035
        %2324 = vmatmul.mubr.f32.gmra.mrb[0].mxu0 %v2034
        %v2325 = vpop.f32.mrb[0].mxu0
        %v2326 = vadd.f32 %v2127, %v2325
        %v2327 = vpop.f32.mrb[0].mxu0
        %2328 = vmatprep.mubr.f32.mxu0 %v2039
        %2329 = vmatmul.mubr.f32.gmra.mrb[0].mxu0 %v2038
        %v2330 = vpop.f32.mrb[0].mxu0
        %v2331 = vadd.f32 %v2127, %v2330
        %v2332 = vpop.f32.mrb[0].mxu0
        %2333 = vmatprep.mubr.f32.mxu0 %v2043
        %2334 = vmatmul.mubr.f32.gmra.mrb[0].mxu0 %v2042
        %v2335 = vpop.f32.mrb[0].mxu0
        %v2336 = vadd.f32 %v2127, %v2335
        %v2337 = vpop.f32.mrb[0].mxu0
        %2338 = vmatprep.mubr.f32.mxu0 %v2047
        %2339 = vmatmul.mubr.f32.gmra.mrb[0].mxu0 %v2046
        %v2340 = vpop.f32.mrb[0].mxu0
        %v2341 = vadd.f32 %v2127, %v2340
        %v2342 = vpop.f32.mrb[0].mxu0
        %2343 = vmatprep.mubr.f32.mxu0 %v2051
        %2344 = vmatmul.mubr.f32.gmra.mrb[0].mxu0 %v2050
        %v2345 = vpop.f32.mrb[0].mxu0
        %v2346 = vadd.f32 %v2127, %v2345
        %v2347 = vpop.f32.mrb[0].mxu0
        %2348 = vmatprep.mubr.f32.mxu0 %v2055
        %2349 = vmatmul.mubr.f32.gmra.mrb[0].mxu0 %v2054
        %v2350 = vpop.f32.mrb[0].mxu0
        %v2351 = vadd.f32 %v2127, %v2350
        %v2352 = vpop.f32.mrb[0].mxu0
        %2353 = vdwg.mxu0
        %2354 = vmatprep.subr.mxu0 0.0
        %2355 = vmatpush1.msra.mxu0 %v2090
        %2356 = vmatprep.subr.mxu0 0.0
        %2357 = vmatpush1.msra.mxu0 %v2091
        %2358 = vmatprep.subr.mxu0 0.0
        %2359 = vmatpush1.msra.mxu0 %v2092
        %2360 = vmatprep.subr.mxu0 0.0
        %2361 = vmatpush1.msra.mxu0 %v2093
        %2362 = vmatprep.subr.mxu0 0.0
        %2363 = vmatpush1.msra.mxu0 %v2094
        %2364 = vmatprep.subr.mxu0 0.0
        %2365 = vmatpush1.msra.mxu0 %v2095
        %2366 = vmatprep.subr.mxu0 0.0
        %2367 = vmatpush1.msra.mxu0 %v2096
        %2368 = vmatprep.subr.mxu0 0.0
        %2369 = vmatpush1.msra.mxu0 %v2097
        %2370 = vmatprep.subr.mxu0 0.0
        %2371 = vmatpush1.msra.mxu0 %v2098
        %2372 = vmatprep.subr.mxu0 0.0
        %2373 = vmatpush1.msra.mxu0 %v2099
        %2374 = vmatprep.subr.mxu0 0.0
        %2375 = vmatpush1.msra.mxu0 %v2100
        %2376 = vmatprep.subr.mxu0 0.0
        %2377 = vmatpush1.msra.mxu0 %v2101
        %2378 = vmatprep.subr.mxu0 0.0
        %2379 = vmatpush1.msra.mxu0 %v2102
        %2380 = vmatprep.subr.mxu0 0.0
        %2381 = vmatpush1.msra.mxu0 %v2103
        %2382 = vmatprep.subr.mxu0 0.0
        %2383 = vmatpush1.msra.mxu0 %v2104
        %2384 = vmatprep.subr.mxu0 0.0
        %2385 = vmatpush1.msra.mxu0 %v2105
        %2386 = vmatprep.subr.mxu0 0.0
        %2387 = vmatpush1.msra.mxu0 %v2106
        %2388 = vmatprep.subr.mxu0 0.0
        %2389 = vmatpush1.msra.mxu0 %v2107
        %2390 = vmatprep.subr.mxu0 0.0
        %2391 = vmatpush1.msra.mxu0 %v2108
        %2392 = vmatprep.subr.mxu0 0.0
        %2393 = vmatpush1.msra.mxu0 %v2109
        %2394 = vmatprep.subr.mxu0 0.0
        %2395 = vmatpush1.msra.mxu0 %v2110
        %2396 = vmatprep.subr.mxu0 0.0
        %2397 = vmatpush1.msra.mxu0 %v2111
        %2398 = vmatprep.subr.mxu0 0.0
        %2399 = vmatpush1.msra.mxu0 %v2112
        %2400 = vmatprep.subr.mxu0 0.0
        %2401 = vmatpush1.msra.mxu0 %v2113
        %2402 = vmatprep.subr.mxu0 0.0
        %2403 = vmatpush1.msra.mxu0 %v2114
        %2404 = vmatprep.subr.mxu0 0.0
        %2405 = vmatpush1.msra.mxu0 %v2115
        %2406 = vmatprep.subr.mxu0 0.0
        %2407 = vmatpush1.msra.mxu0 %v2116
        %2408 = vmatprep.subr.mxu0 0.0
        %2409 = vmatpush1.msra.mxu0 %v2117
        %2410 = vmatprep.subr.mxu0 0.0
        %2411 = vmatpush1.msra.mxu0 %v2118
        %2412 = vmatprep.subr.mxu0 0.0
        %2413 = vmatpush1.msra.mxu0 %v2119
        %2414 = vmatprep.subr.mxu0 0.0
        %2415 = vmatpush1.msra.mxu0 %v2120
        %2416 = vmatprep.subr.mxu0 0.0
        %2417 = vmatpush1.msra.mxu0 %v2121
        %2418 = vmatprep.mubr.f32.mxu0 %v1933
        %2419 = vmatmul.mubr.f32.gmra.mrb[0].mxu0 %v1932
        %v2420 = vpop.f32.mrb[0].mxu0
        %v2421 = vadd.f32 %v2196, %v2420
        %v2422 = vpop.f32.mrb[0].mxu0
        %2423 = vmatprep.mubr.f32.mxu0 %v1937
        %2424 = vmatmul.mubr.f32.gmra.mrb[0].mxu0 %v1936
        %v2425 = vpop.f32.mrb[0].mxu0
        %v2426 = vadd.f32 %v2201, %v2425
        %v2427 = vpop.f32.mrb[0].mxu0
        %2428 = vmatprep.mubr.f32.mxu0 %v1941
        %2429 = vmatmul.mubr.f32.gmra.mrb[0].mxu0 %v1940
        %v2430 = vpop.f32.mrb[0].mxu0
        %v2431 = vadd.f32 %v2206, %v2430
        %v2432 = vpop.f32.mrb[0].mxu0
        %2433 = vmatprep.mubr.f32.mxu0 %v1945
        %2434 = vmatmul.mubr.f32.gmra.mrb[0].mxu0 %v1944
        %v2435 = vpop.f32.mrb[0].mxu0
        %v2436 = vadd.f32 %v2211, %v2435
        %v2437 = vpop.f32.mrb[0].mxu0
        %2438 = vmatprep.mubr.f32.mxu0 %v1949
        %2439 = vmatmul.mubr.f32.gmra.mrb[0].mxu0 %v1948
        %v2440 = vpop.f32.mrb[0].mxu0
        %v2441 = vadd.f32 %v2216, %v2440
        %v2442 = vpop.f32.mrb[0].mxu0
        %2443 = vmatprep.mubr.f32.mxu0 %v1953
        %2444 = vmatmul.mubr.f32.gmra.mrb[0].mxu0 %v1952
        %v2445 = vpop.f32.mrb[0].mxu0
        %v2446 = vadd.f32 %v2221, %v2445
        %v2447 = vpop.f32.mrb[0].mxu0
        %2448 = vmatprep.mubr.f32.mxu0 %v1957
        %2449 = vmatmul.mubr.f32.gmra.mrb[0].mxu0 %v1956
        %v2450 = vpop.f32.mrb[0].mxu0
        %v2451 = vadd.f32 %v2226, %v2450
        %v2452 = vpop.f32.mrb[0].mxu0
        %2453 = vmatprep.mubr.f32.mxu0 %v1961
        %2454 = vmatmul.mubr.f32.gmra.mrb[0].mxu0 %v1960
        %v2455 = vpop.f32.mrb[0].mxu0
        %v2456 = vadd.f32 %v2231, %v2455
        %v2457 = vpop.f32.mrb[0].mxu0
        %2458 = vmatprep.mubr.f32.mxu0 %v1965
        %2459 = vmatmul.mubr.f32.gmra.mrb[0].mxu0 %v1964
        %v2460 = vpop.f32.mrb[0].mxu0
        %v2461 = vadd.f32 %v2236, %v2460
        %v2462 = vpop.f32.mrb[0].mxu0
        %2463 = vmatprep.mubr.f32.mxu0 %v1969
        %2464 = vmatmul.mubr.f32.gmra.mrb[0].mxu0 %v1968
        %v2465 = vpop.f32.mrb[0].mxu0
        %v2466 = vadd.f32 %v2241, %v2465
        %v2467 = vpop.f32.mrb[0].mxu0
        %2468 = vmatprep.mubr.f32.mxu0 %v1973
        %2469 = vmatmul.mubr.f32.gmra.mrb[0].mxu0 %v1972
        %v2470 = vpop.f32.mrb[0].mxu0
        %v2471 = vadd.f32 %v2246, %v2470
        %v2472 = vpop.f32.mrb[0].mxu0
        %2473 = vmatprep.mubr.f32.mxu0 %v1977
        %2474 = vmatmul.mubr.f32.gmra.mrb[0].mxu0 %v1976
        %v2475 = vpop.f32.mrb[0].mxu0
        %v2476 = vadd.f32 %v2251, %v2475
        %v2477 = vpop.f32.mrb[0].mxu0
        %2478 = vmatprep.mubr.f32.mxu0 %v1981
        %2479 = vmatmul.mubr.f32.gmra.mrb[0].mxu0 %v1980
        %v2480 = vpop.f32.mrb[0].mxu0
        %v2481 = vadd.f32 %v2256, %v2480
        %v2482 = vpop.f32.mrb[0].mxu0
        %2483 = vmatprep.mubr.f32.mxu0 %v1985
        %2484 = vmatmul.mubr.f32.gmra.mrb[0].mxu0 %v1984
        %v2485 = vpop.f32.mrb[0].mxu0
        %v2486 = vadd.f32 %v2261, %v2485
        %v2487 = vpop.f32.mrb[0].mxu0
        %2488 = vmatprep.mubr.f32.mxu0 %v1989
        %2489 = vmatmul.mubr.f32.gmra.mrb[0].mxu0 %v1988
        %v2490 = vpop.f32.mrb[0].mxu0
        %v2491 = vadd.f32 %v2266, %v2490
        %v2492 = vpop.f32.mrb[0].mxu0
        %2493 = vmatprep.mubr.f32.mxu0 %v1993
        %2494 = vmatmul.mubr.f32.gmra.mrb[0].mxu0 %v1992
        %v2495 = vpop.f32.mrb[0].mxu0
        %v2496 = vadd.f32 %v2271, %v2495
        %v2497 = vpop.f32.mrb[0].mxu0
        %2498 = vmatprep.mubr.f32.mxu0 %v1997
        %2499 = vmatmul.mubr.f32.gmra.mrb[0].mxu0 %v1996
        %v2500 = vpop.f32.mrb[0].mxu0
        %v2501 = vadd.f32 %v2276, %v2500
        %v2502 = vpop.f32.mrb[0].mxu0
        %2503 = vmatprep.mubr.f32.mxu0 %v2001
        %2504 = vmatmul.mubr.f32.gmra.mrb[0].mxu0 %v2000
        %v2505 = vpop.f32.mrb[0].mxu0
        %v2506 = vadd.f32 %v2281, %v2505
        %v2507 = vpop.f32.mrb[0].mxu0
        %2508 = vmatprep.mubr.f32.mxu0 %v2005
        %2509 = vmatmul.mubr.f32.gmra.mrb[0].mxu0 %v2004
        %v2510 = vpop.f32.mrb[0].mxu0
        %v2511 = vadd.f32 %v2286, %v2510
        %v2512 = vpop.f32.mrb[0].mxu0
        %2513 = vmatprep.mubr.f32.mxu0 %v2009
        %2514 = vmatmul.mubr.f32.gmra.mrb[0].mxu0 %v2008
        %v2515 = vpop.f32.mrb[0].mxu0
        %v2516 = vadd.f32 %v2291, %v2515
        %v2517 = vpop.f32.mrb[0].mxu0
        %2518 = vmatprep.mubr.f32.mxu0 %v2013
        %2519 = vmatmul.mubr.f32.gmra.mrb[0].mxu0 %v2012
        %v2520 = vpop.f32.mrb[0].mxu0
        %v2521 = vadd.f32 %v2296, %v2520
        %v2522 = vpop.f32.mrb[0].mxu0
        %2523 = vmatprep.mubr.f32.mxu0 %v2017
        %2524 = vmatmul.mubr.f32.gmra.mrb[0].mxu0 %v2016
        %v2525 = vpop.f32.mrb[0].mxu0
        %v2526 = vadd.f32 %v2301, %v2525
        %v2527 = vpop.f32.mrb[0].mxu0
        %2528 = vmatprep.mubr.f32.mxu0 %v2021
        %2529 = vmatmul.mubr.f32.gmra.mrb[0].mxu0 %v2020
        %v2530 = vpop.f32.mrb[0].mxu0
        %v2531 = vadd.f32 %v2306, %v2530
        %v2532 = vpop.f32.mrb[0].mxu0
        %2533 = vmatprep.mubr.f32.mxu0 %v2025
        %2534 = vmatmul.mubr.f32.gmra.mrb[0].mxu0 %v2024
        %v2535 = vpop.f32.mrb[0].mxu0
        %v2536 = vadd.f32 %v2311, %v2535
        %v2537 = vpop.f32.mrb[0].mxu0
        %2538 = vmatprep.mubr.f32.mxu0 %v2029
        %2539 = vmatmul.mubr.f32.gmra.mrb[0].mxu0 %v2028
        %v2540 = vpop.f32.mrb[0].mxu0
        %v2541 = vadd.f32 %v2316, %v2540
        %v2542 = vpop.f32.mrb[0].mxu0
        %2543 = vmatprep.mubr.f32.mxu0 %v2033
        %2544 = vmatmul.mubr.f32.gmra.mrb[0].mxu0 %v2032
        %v2545 = vpop.f32.mrb[0].mxu0
        %v2546 = vadd.f32 %v2321, %v2545
        %v2547 = vpop.f32.mrb[0].mxu0
        %2548 = vmatprep.mubr.f32.mxu0 %v2037
        %2549 = vmatmul.mubr.f32.gmra.mrb[0].mxu0 %v2036
        %v2550 = vpop.f32.mrb[0].mxu0
        %v2551 = vadd.f32 %v2326, %v2550
        %v2552 = vpop.f32.mrb[0].mxu0
        %2553 = vmatprep.mubr.f32.mxu0 %v2041
        %2554 = vmatmul.mubr.f32.gmra.mrb[0].mxu0 %v2040
        %v2555 = vpop.f32.mrb[0].mxu0
        %v2556 = vadd.f32 %v2331, %v2555
        %v2557 = vpop.f32.mrb[0].mxu0
        %2558 = vmatprep.mubr.f32.mxu0 %v2045
        %2559 = vmatmul.mubr.f32.gmra.mrb[0].mxu0 %v2044
        %v2560 = vpop.f32.mrb[0].mxu0
        %v2561 = vadd.f32 %v2336, %v2560
        %v2562 = vpop.f32.mrb[0].mxu0
        %2563 = vmatprep.mubr.f32.mxu0 %v2049
        %2564 = vmatmul.mubr.f32.gmra.mrb[0].mxu0 %v2048
        %v2565 = vpop.f32.mrb[0].mxu0
        %v2566 = vadd.f32 %v2341, %v2565
        %v2567 = vpop.f32.mrb[0].mxu0
        %2568 = vmatprep.mubr.f32.mxu0 %v2053
        %2569 = vmatmul.mubr.f32.gmra.mrb[0].mxu0 %v2052
        %v2570 = vpop.f32.mrb[0].mxu0
        %v2571 = vadd.f32 %v2346, %v2570
        %v2572 = vpop.f32.mrb[0].mxu0
        %2573 = vmatprep.mubr.f32.mxu0 %v2057
        %2574 = vmatmul.mubr.f32.gmra.mrb[0].mxu0 %v2056
        %v2575 = vpop.f32.mrb[0].mxu0
        %v2576 = vadd.f32 %v2351, %v2575
        %v2577 = vpop.f32.mrb[0].mxu0
        %2578 = vdwg.mxu0
        %2579 = vst [vmem:[%s271] sm:$0xff] %v2421
        %2580 = vst [vmem:[%s271 + $0x8] sm:$0xff] %v2426
        %2581 = vst [vmem:[%s271 + $0x10] sm:$0xff] %v2431
        %2582 = vst [vmem:[%s271 + $0x18] sm:$0xff] %v2436
        %2583 = vst [vmem:[%s271 + $0x20] sm:$0xff] %v2441
        %2584 = vst [vmem:[%s271 + $0x28] sm:$0xff] %v2446
        %2585 = vst [vmem:[%s271 + $0x30] sm:$0xff] %v2451
        %2586 = vst [vmem:[%s271 + $0x38] sm:$0xff] %v2456
        %2587 = vst [vmem:[%s271 + $0x40] sm:$0xff] %v2461
        %2588 = vst [vmem:[%s271 + $0x48] sm:$0xff] %v2466
        %2589 = vst [vmem:[%s271 + $0x50] sm:$0xff] %v2471
        %2590 = vst [vmem:[%s271 + $0x58] sm:$0xff] %v2476
        %2591 = vst [vmem:[%s271 + $0x60] sm:$0xff] %v2481
        %2592 = vst [vmem:[%s271 + $0x68] sm:$0xff] %v2486
        %2593 = vst [vmem:[%s271 + $0x70] sm:$0xff] %v2491
        %2594 = vst [vmem:[%s271 + $0x78] sm:$0xff] %v2496
        %2595 = vst [vmem:[%s271 + $0x80] sm:$0xff] %v2501
        %2596 = vst [vmem:[%s271 + $0x88] sm:$0xff] %v2506
        %2597 = vst [vmem:[%s271 + $0x90] sm:$0xff] %v2511
        %2598 = vst [vmem:[%s271 + $0x98] sm:$0xff] %v2516
        %2599 = vst [vmem:[%s271 + $0xa0] sm:$0xff] %v2521
        %2600 = vst [vmem:[%s271 + $0xa8] sm:$0xff] %v2526
        %2601 = vst [vmem:[%s271 + $0xb0] sm:$0xff] %v2531
        %2602 = vst [vmem:[%s271 + $0xb8] sm:$0xff] %v2536
        %2603 = vst [vmem:[%s271 + $0xc0] sm:$0xff] %v2541
        %2604 = vst [vmem:[%s271 + $0xc8] sm:$0xff] %v2546
        %2605 = vst [vmem:[%s271 + $0xd0] sm:$0xff] %v2551
        %2606 = vst [vmem:[%s271 + $0xd8] sm:$0xff] %v2556
        %2607 = vst [vmem:[%s271 + $0xe0] sm:$0xff] %v2561
        %2608 = vst [vmem:[%s271 + $0xe8] sm:$0xff] %v2566
        %2609 = vst [vmem:[%s271 + $0xf0] sm:$0xff] %v2571
        %2610 = vst [vmem:[%s271 + $0xf8] sm:$0xff] %v2576
        %s2611 = sand.u32 %s141, 1
        %s2612 = scalar_lea.sflag [#allocation4], %s2611
        %s2613 = sand.u32 %s141, 1
        %s2614 = smul.addr %s2613, 256
        %s2615 = scalar_lea.vmem [#allocation8], %s2614
        // Predicated region
        $region53: #{tpu_custom_call.1} parent=39 // pred_check
          %p2616 = pneg %p151
        $region54: #{tpu_custom_call.1} parent=39 // pred_check_branch
          %2618 = sbr.rel (%p2616) target = $region56
        $region55: #{tpu_custom_call.1} parent=39 // pred_region
          %s2619 = smul.u32 32, %s23
          %s2621 = ssub.s32 4096, 4096
          %2622 = vsyncadd %s2612, %s2621
          %s2623 = smul.addr %s2619, 128
          %s2624 = scalar_lea.hbm %s5, %s2623
          %s2625 = sshll.u32 %s2615, 4
          %s2626 = int_to_ptr.vmem [resolvable:$true] %s2625
          %2631 = dma.vmem_to_hbm [thread:$0]  %s2626, 4096, %s2624, %s2612, 128, 128, 8
        $region56: #{tpu_custom_call.1} parent=39 // pred_fallthru
          _
      $region40: #{tpu_custom_call.1} parent=5 // pred_fallthru
        _
      %p2632 = scmp.le.s32.totalorder 2, %s18
      // Predicated region
      $region57: #{tpu_custom_call.1} parent=5 // pred_check
        %p2633 = pneg %p2632
      $region58: #{tpu_custom_call.1} parent=5 // pred_check_branch
        %2635 = sbr.rel (%p2633) target = $region60
      $region59: #{tpu_custom_call.1} parent=5 // pred_region
        %s2636 = ssub.s32 %s18, 2
        // Predicated region
        $region61: #{tpu_custom_call.1} parent=59 // pred_check
          %p2637 = pneg %p157
        $region62: #{tpu_custom_call.1} parent=59 // pred_check_branch
          %2639 = sbr.rel (%p2637) target = $region64
        $region63: #{tpu_custom_call.1} parent=59 // pred_region
          %s2640 = sand.u32 %s142, 1
          %s2641 = scalar_lea.sflag [#allocation4], %s2640
          %s2642 = sand.u32 %s142, 1
          %s2643 = smul.addr %s2642, 256
          %s2644 = scalar_lea.vmem [#allocation8], %s2643
          %2645 = dma.done %s2641, 4096
        $region64: #{tpu_custom_call.1} parent=59 // pred_fallthru
          _
      $region60: #{tpu_custom_call.1} parent=5 // pred_fallthru
        _
    $region6: #{tpu_custom_call.1} parent=1 // loop_footer
      %s22 = sadd.s32 1, %s18
    $region7: #{tpu_custom_call.1} parent=1 // loop_footer_branch
      %17 = sbr.rel target = $region3
    $region8: #{tpu_custom_call.1} parent=1 // loop_exit
      _
    %2646 = vsyncpa [#allocation3], 1
    %s2647 = scalar_lea.sflag [#allocation3], 1
    %2648 = vsyncpa %s2647, 1
    %2649 = vsyncpa [#allocation6], 1
    %2650 = vsyncpa [#allocation4], 1
    %s2651 = scalar_lea.sflag [#allocation4], 1
    %2652 = vsyncpa %s2651, 1

</llo_original>
